<compile_context>
chip_gen: v6e
topology: v6e:2x2x1
jax: 0.10.0
libtpu: 0.0.40
codegen_flags: <defaults>
</compile_context>

<pallas_src>
import jax
import jax.numpy as jnp
from jax.experimental import pallas as pl
from jax.experimental.pallas import tpu as pltpu

_LANES = 128
_MIN_PALLAS_ROWS = 64        # below this, a pallas_call is pure overhead


def _round_up(x, m):
    return ((x + m - 1) // m) * m


def _cdiv(a, b):
    return (a + b - 1) // b


# ----------------------------------------------------------------------------
# per-generation VMEM budgets
# ----------------------------------------------------------------------------
_TPU_BUDGETS = None


def _budgets():
    """(compute-tile budget, vmem_limit_bytes) sized per TPU generation."""
    global _TPU_BUDGETS
    if _TPU_BUDGETS is None:
        cap = 64 * 1024 * 1024                       # conservative (v7x-sized)
        try:
            info = pltpu.get_tpu_info()
            for attr in ("vmem_capacity_bytes", "vmem_size_bytes", "vmem_bytes"):
                v = getattr(info, attr, None)
                if v:
                    cap = int(v)
                    break
        except Exception:
            pass
        if cap >= 100 * 1024 * 1024:                 # v5e / v6e: 128 MiB VMEM
            _TPU_BUDGETS = (40 * 1024 * 1024, 80 * 1024 * 1024)
        else:                                        # v7x (64 MiB) or unknown
            _TPU_BUDGETS = (20 * 1024 * 1024, 44 * 1024 * 1024)
    return _TPU_BUDGETS


# ----------------------------------------------------------------------------
# tile sizing
# ----------------------------------------------------------------------------
def _pick_tiles(rtot, lanes_in, budget):
    """Rows per grid block (multiple of 8), padded row count, #blocks.

    Accounts for double-buffered bf16 input (lanes padded to 128 in VMEM),
    double-buffered bf16 output and the in-kernel f32 accumulator.
    """
    per_row = 4 * lanes_in + 1024
    tr = max(8, min(8192, (budget // max(per_row, 1)) // 8 * 8))
    rpad8 = _round_up(rtot, 8)
    tr = min(tr, rpad8)
    nblk = _cdiv(rpad8, tr)
    if rpad8 >= 256:
        # keep >=2 blocks and an even count so megacore / both v7x TCs get
        # balanced work on the "parallel" grid axis (review #8)
        if nblk < 2:
            nblk = 2
        if nblk % 2:
            nblk += 1
        tr = min(rpad8, _round_up(_cdiv(rpad8, nblk), 8))
        nblk = _cdiv(rpad8, tr)
    return tr, tr * nblk, nblk


# ----------------------------------------------------------------------------
# Pallas kernel: one MXU matmul (K = 9*Cin) + folded-BN bias + ReLU
# ----------------------------------------------------------------------------
def _conv_kernel(x_ref, w_ref, b_ref, o_ref):
    # x_ref: (TR, Kp) bf16 im2col rows; w_ref: (Kp, Coutp) bf16 (BN scale
    # folded); b_ref: (1, Coutp) f32 folded-BN bias; o_ref: (TR, Coutp) bf16.
    acc = jnp.dot(x_ref[...], w_ref[...], preferred_element_type=jnp.float32)
    o_ref[...] = jnp.maximum(acc + b_ref[...], 0.0).astype(o_ref.dtype)


def _xla_conv_bn_relu(x_bf16, w, scale, bias, stride):
    """Plain-XLA fallback for tiny layers; identical numerics (bf16 operands,
    f32 accumulate) to the Pallas path."""
    wf = (w.astype(jnp.float32) * scale[None, None, None, :]).astype(jnp.bfloat16)
    y = jax.lax.conv_general_dilated(
        x_bf16.astype(jnp.float32), wf.astype(jnp.float32),
        window_strides=(stride, stride), padding=((1, 1), (1, 1)),
        dimension_numbers=("NHWC", "HWIO", "NHWC"))
    return jnp.maximum(y + bias[None, None, None, :], 0.0).astype(jnp.bfloat16)


def conv3x3_bn_relu(x_bf16, w, scale, bias, stride):
    """3x3 conv (pad=1, no conv bias) + folded BatchNorm + ReLU, NHWC bf16."""
    N, H, W, Cin = x_bf16.shape
    kh, kw, _, Cout = w.shape
    assert (kh, kw) == (3, 3)
    s = int(stride)
    Ho = (H - 1) // s + 1
    Wo = (W - 1) // s + 1
    R = N * Ho * Wo

    if R < _MIN_PALLAS_ROWS:
        return _xla_conv_bn_relu(x_bf16, w, scale, bias, s)   # review #11

    # ---- wrapper-side layout prep (fused XLA slicing, no compute) ----------
    xp = jnp.pad(x_bf16, ((0, 0), (1, 1), (1, 1), (0, 0)))
    # Exact im2col: tap (di,dj) value for output (ho,wo) is xp[ho*s+di, wo*s+dj],
    # gathered by 9 strided slices and packed along the lane (channel) axis.
    # No halo columns / no in-kernel row shifts are needed.
    taps = []
    for di in range(3):
        for dj in range(3):
            taps.append(xp[:, di:di + (Ho - 1) * s + 1:s,
                           dj:dj + (Wo - 1) * s + 1:s, :])
    xcol = jnp.concatenate(taps, axis=-1)                 # (N, Ho, Wo, 9*Cin)

    K = 9 * Cin
    Kp = _round_up(K, 16)                                 # bf16 sublane packing
    Coutp = _round_up(Cout, _LANES)                       # lane-dense stores
    lanes_in = _round_up(Kp, _LANES)                      # VMEM lane footprint
    budget, vmem_limit = _budgets()
    TR, Rpad, nblk = _pick_tiles(R, lanes_in, budget)

    xcol = xcol.reshape(R, K)
    if Kp != K:
        xcol = jnp.pad(xcol, ((0, 0), (0, Kp - K)))
    if Rpad != R:
        xcol = jnp.pad(xcol, ((0, Rpad - R), (0, 0)))

    # fold BN scale into the weights; pad K and Cout (zero padding keeps the
    # extra output lanes at relu(0)=0, sliced away below)
    wf = (w.astype(jnp.float32) * scale[None, None, None, :]).reshape(K, Cout)
    wf = jnp.pad(wf, ((0, Kp - K), (0, Coutp - Cout))).astype(jnp.bfloat16)
    bf = jnp.pad(bias.astype(jnp.float32), (0, Coutp - Cout)).reshape(1, Coutp)

    out = pl.pallas_call(
        _conv_kernel,
        out_shape=jax.ShapeDtypeStruct((Rpad, Coutp), jnp.bfloat16),
        grid=(nblk,),
        in_specs=[
            pl.BlockSpec((TR, Kp), lambda i: (i, 0)),
            pl.BlockSpec((Kp, Coutp), lambda i: (0, 0)),
            pl.BlockSpec((1, Coutp), lambda i: (0, 0)),
        ],
        out_specs=pl.BlockSpec((TR, Coutp), lambda i: (i, 0)),
        compiler_params=pltpu.CompilerParams(
            dimension_semantics=("parallel",),
            vmem_limit_bytes=vmem_limit),
    )(xcol, wf, bf)

    return out[:R, :Cout].reshape(N, Ho, Wo, Cout)


# ----------------------------------------------------------------------------
# BasicFeature re-implementation
# ----------------------------------------------------------------------------
def _fold_bn(gamma, beta, mean, var, eps=1e-5):
    scale = gamma / jnp.sqrt(var + eps)
    bias = beta - mean * scale
    return scale, bias


def _init_layer(key, cin, cout):
    kw_, kg_ = jax.random.split(key)
    fan_in = 3 * 3 * cin
    w = jax.random.normal(kw_, (3, 3, cin, cout), jnp.float32) / jnp.sqrt(fan_in)
    gamma = 1.0 + 0.05 * jax.random.normal(kg_, (cout,), jnp.float32)
    beta = jnp.zeros((cout,), jnp.float32)
    mean = jnp.zeros((cout,), jnp.float32)
    var = jnp.ones((cout,), jnp.float32)
    scale, bias = _fold_bn(gamma, beta, mean, var)
    return {"w": w, "scale": scale, "bias": bias}


_LAYER_NAMES = ("stem", "block0", "block1", "block2", "block3", "block4")
_LAYER_STRIDES = (2, 1, 2, 2, 2, 2)


def _forward(params, x_nchw):
    x = jnp.transpose(x_nchw, (0, 2, 3, 1)).astype(jnp.bfloat16)  # NCHW->NHWC
    feats = []
    for name, s in zip(_LAYER_NAMES, _LAYER_STRIDES):
        p = params[name]
        x = conv3x3_bn_relu(x, p["w"], p["scale"], p["bias"], s)
        feats.append(x)
    to_nchw = lambda t: jnp.transpose(t, (0, 3, 1, 2)).astype(jnp.float32)
    x2 = to_nchw(feats[1])
    x_out = [to_nchw(feats[2]), to_nchw(feats[3]),
             to_nchw(feats[4]), to_nchw(feats[5])]
    return x2, x_out


_forward_jit = jax.jit(_forward)


def _ref_forward(params, x_nchw):
    """Pure-JAX reference (lax conv, same bf16-storage / f32-accumulate
    numerics) for validation of the Pallas layers."""
    x = jnp.transpose(x_nchw, (0, 2, 3, 1)).astype(jnp.bfloat16)
    feats = []
    for name, s in zip(_LAYER_NAMES, _LAYER_STRIDES):
        p = params[name]
        x = _xla_conv_bn_relu(x, p["w"], p["scale"], p["bias"], s)
        feats.append(x)
    to_nchw = lambda t: jnp.transpose(t, (0, 3, 1, 2)).astype(jnp.float32)
    x2 = to_nchw(feats[1])
    x_out = [to_nchw(feats[2]), to_nchw(feats[3]),
             to_nchw(feats[4]), to_nchw(feats[5])]
    return x2, x_out


class BasicFeaturePallas:
    """Pallas/JAX analogue of stereo.modules.feature.BasicFeature."""

    STEM_CH = 8

    def __init__(self, cfg, key):
        self.type = cfg["type"]
        chans = cfg["channels"]
        keys = jax.random.split(key, 6)
        self.params = {
            "stem": _init_layer(keys[0], 3, self.STEM_CH),            # /2
            "block0": _init_layer(keys[1], self.STEM_CH, chans[0]),   # /2
            "block1": _init_layer(keys[2], chans[0], chans[1]),       # /4
            "block2": _init_layer(keys[3], chans[1], chans[2]),       # /8
            "block3": _init_layer(keys[4], chans[2], chans[3]),       # /16
            "block4": _init_layer(keys[5], chans[3], chans[4]),       # /32
        }

    def __call__(self, x_nchw):
        return _forward_jit(self.params, x_nchw)


if __name__ == "__main__":
    cfg = {
        "type": "mobilenetv2_100",
        "channels": [16, 24, 32, 48, 64],
        "layers": [1, 2, 3, 5, 7],
        "pretrained": False,
    }
    key = jax.random.PRNGKey(0)
    k_param, k_input = jax.random.split(key)

    model = BasicFeaturePallas(cfg, k_param)

    # small NCHW input (batch=2, 3 channels, 32x32 so that /32 scale is 1x1)
    x = jax.random.normal(k_input, (2, 3, 32, 32), jnp.float32)

    x2, x_out = model(x)
    x2 = jax.block_until_ready(x2)
    x_out = [jax.block_until_ready(t) for t in x_out]

    expected = [
        (2, 16, 16, 16),          # x2  (/2)
        (2, 24, 8, 8),            # x4  (/4)
        (2, 32, 4, 4),            # x8  (/8)
        (2, 48, 2, 2),            # x16 (/16)
        (2, 64, 1, 1),            # x32 (/32)
    ]
    got = [tuple(x2.shape)] + [tuple(t.shape) for t in x_out]
    assert got == expected, (got, expected)

    # numerical check vs. a lax.conv reference with matched bf16/f32 numerics
    r2, r_out = _ref_forward(model.params, x)
    for a, b in zip([x2] + x_out, [r2] + list(r_out)):
        err = float(jnp.max(jnp.abs(a - b)))
        ref = float(jnp.max(jnp.abs(b))) + 1e-6
        assert err / ref < 2e-2, (err, ref)

    print("KERNEL_OK")
</pallas_src>

<mosaic_0001>
module attributes {stable_mosaic.version = 11 : i64} {
  func.func @_conv_kernel(%arg0: i32, %arg1: memref<256x32xbf16, #tpu.memory_space<vmem>>, %arg2: memref<32x128xbf16, #tpu.memory_space<vmem>>, %arg3: memref<1x128xf32, #tpu.memory_space<vmem>>, %arg4: memref<256x128xbf16, #tpu.memory_space<vmem>>) attributes {dimension_semantics = [#tpu.dimension_semantics<parallel>], iteration_bounds = array<i64: 2>, scalar_prefetch = 0 : i64, scratch_operands = 0 : i64, tpu.core_type = #tpu.core_type<tc>, window_params = [{transform_indices = @transform_0, window_bounds = array<i64: 256, 32>}, {pipeline_mode = #tpu.pipeline_mode<synchronous>, transform_indices = @transform_1, window_bounds = array<i64: 32, 128>}, {pipeline_mode = #tpu.pipeline_mode<synchronous>, transform_indices = @transform_2, window_bounds = array<i64: 1, 128>}, {transform_indices = @transform_3, window_bounds = array<i64: 256, 128>}]} {
    %c0 = arith.constant 0 : index
    %c0_0 = arith.constant 0 : index
    %0 = vector.load %arg1[%c0, %c0_0] : memref<256x32xbf16, #tpu.memory_space<vmem>>, vector<256x32xbf16>
    %c0_1 = arith.constant 0 : index
    %c0_2 = arith.constant 0 : index
    %1 = vector.load %arg2[%c0_1, %c0_2] : memref<32x128xbf16, #tpu.memory_space<vmem>>, vector<32x128xbf16>
    %cst = arith.constant dense<0.000000e+00> : vector<256x128xf32>
    %2 = tpu.matmul %0, %1, %cst {dimension_numbers = #tpu.dot_dimension_numbers<[1], [0], [0], [1], [0, 0, 1, 1], [], []>} : vector<256x32xbf16>, vector<32x128xbf16>, vector<256x128xf32> -> vector<256x128xf32>
    %c0_3 = arith.constant 0 : index
    %c0_4 = arith.constant 0 : index
    %3 = vector.load %arg3[%c0_3, %c0_4] : memref<1x128xf32, #tpu.memory_space<vmem>>, vector<1x128xf32>
    %4 = vector.broadcast %3 : vector<1x128xf32> to vector<256x128xf32>
    %5 = arith.addf %2, %4 : vector<256x128xf32>
    %cst_5 = arith.constant 0.000000e+00 : f32
    %6 = vector.broadcast %cst_5 : f32 to vector<256x128xf32>
    %7 = arith.maximumf %5, %6 : vector<256x128xf32>
    %8 = arith.truncf %7 : vector<256x128xf32> to vector<256x128xbf16>
    %c0_6 = arith.constant 0 : index
    %c0_7 = arith.constant 0 : index
    %9 = vector.load %arg4[%c0_6, %c0_7] : memref<256x128xbf16, #tpu.memory_space<vmem>>, vector<256x128xbf16>
    tpu.vector_store %arg4[%c0_6, %c0_7], %8 {strides = array<i32>} : memref<256x128xbf16, #tpu.memory_space<vmem>>, vector<256x128xbf16>,
    return
  }
  func.func @transform_0(%arg0: i32) -> (i32, i32) {
    %c0_i32 = arith.constant 0 : i32
    %c0_i32_0 = arith.constant 0 : i32
    return %arg0, %c0_i32 : i32, i32
  }
  func.func @transform_1(%arg0: i32) -> (i32, i32) {
    %c0_i32 = arith.constant 0 : i32
    %c0_i32_0 = arith.constant 0 : i32
    %c0_i32_1 = arith.constant 0 : i32
    return %c0_i32, %c0_i32_0 : i32, i32
  }
  func.func @transform_2(%arg0: i32) -> (i32, i32) {
    %c0_i32 = arith.constant 0 : i32
    %c0_i32_0 = arith.constant 0 : i32
    %c0_i32_1 = arith.constant 0 : i32
    return %c0_i32, %c0_i32_0 : i32, i32
  }
  func.func @transform_3(%arg0: i32) -> (i32, i32) {
    %c0_i32 = arith.constant 0 : i32
    %c0_i32_0 = arith.constant 0 : i32
    return %arg0, %c0_i32 : i32, i32
  }
}

module attributes {stable_mosaic.version = 11 : i64} {
  func.func @_conv_kernel(%arg0: i32, %arg1: memref<256x80xbf16, #tpu.memory_space<vmem>>, %arg2: memref<80x128xbf16, #tpu.memory_space<vmem>>, %arg3: memref<1x128xf32, #tpu.memory_space<vmem>>, %arg4: memref<256x128xbf16, #tpu.memory_space<vmem>>) attributes {dimension_semantics = [#tpu.dimension_semantics<parallel>], iteration_bounds = array<i64: 2>, scalar_prefetch = 0 : i64, scratch_operands = 0 : i64, tpu.core_type = #tpu.core_type<tc>, window_params = [{transform_indices = @transform_0, window_bounds = array<i64: 256, 80>}, {pipeline_mode = #tpu.pipeline_mode<synchronous>, transform_indices = @transform_1, window_bounds = array<i64: 80, 128>}, {pipeline_mode = #tpu.pipeline_mode<synchronous>, transform_indices = @transform_2, window_bounds = array<i64: 1, 128>}, {transform_indices = @transform_3, window_bounds = array<i64: 256, 128>}]} {
    %c0 = arith.constant 0 : index
    %c0_0 = arith.constant 0 : index
    %0 = vector.load %arg1[%c0, %c0_0] : memref<256x80xbf16, #tpu.memory_space<vmem>>, vector<256x80xbf16>
    %c0_1 = arith.constant 0 : index
    %c0_2 = arith.constant 0 : index
    %1 = vector.load %arg2[%c0_1, %c0_2] : memref<80x128xbf16, #tpu.memory_space<vmem>>, vector<80x128xbf16>
    %cst = arith.constant dense<0.000000e+00> : vector<256x128xf32>
    %2 = tpu.matmul %0, %1, %cst {dimension_numbers = #tpu.dot_dimension_numbers<[1], [0], [0], [1], [0, 0, 1, 1], [], []>} : vector<256x80xbf16>, vector<80x128xbf16>, vector<256x128xf32> -> vector<256x128xf32>
    %c0_3 = arith.constant 0 : index
    %c0_4 = arith.constant 0 : index
    %3 = vector.load %arg3[%c0_3, %c0_4] : memref<1x128xf32, #tpu.memory_space<vmem>>, vector<1x128xf32>
    %4 = vector.broadcast %3 : vector<1x128xf32> to vector<256x128xf32>
    %5 = arith.addf %2, %4 : vector<256x128xf32>
    %cst_5 = arith.constant 0.000000e+00 : f32
    %6 = vector.broadcast %cst_5 : f32 to vector<256x128xf32>
    %7 = arith.maximumf %5, %6 : vector<256x128xf32>
    %8 = arith.truncf %7 : vector<256x128xf32> to vector<256x128xbf16>
    %c0_6 = arith.constant 0 : index
    %c0_7 = arith.constant 0 : index
    %9 = vector.load %arg4[%c0_6, %c0_7] : memref<256x128xbf16, #tpu.memory_space<vmem>>, vector<256x128xbf16>
    tpu.vector_store %arg4[%c0_6, %c0_7], %8 {strides = array<i32>} : memref<256x128xbf16, #tpu.memory_space<vmem>>, vector<256x128xbf16>,
    return
  }
  func.func @transform_0(%arg0: i32) -> (i32, i32) {
    %c0_i32 = arith.constant 0 : i32
    %c0_i32_0 = arith.constant 0 : i32
    return %arg0, %c0_i32 : i32, i32
  }
  func.func @transform_1(%arg0: i32) -> (i32, i32) {
    %c0_i32 = arith.constant 0 : i32
    %c0_i32_0 = arith.constant 0 : i32
    %c0_i32_1 = arith.constant 0 : i32
    return %c0_i32, %c0_i32_0 : i32, i32
  }
  func.func @transform_2(%arg0: i32) -> (i32, i32) {
    %c0_i32 = arith.constant 0 : i32
    %c0_i32_0 = arith.constant 0 : i32
    %c0_i32_1 = arith.constant 0 : i32
    return %c0_i32, %c0_i32_0 : i32, i32
  }
  func.func @transform_3(%arg0: i32) -> (i32, i32) {
    %c0_i32 = arith.constant 0 : i32
    %c0_i32_0 = arith.constant 0 : i32
    return %arg0, %c0_i32 : i32, i32
  }
}

module attributes {stable_mosaic.version = 11 : i64} {
  func.func @_conv_kernel(%arg0: i32, %arg1: memref<128x144xbf16, #tpu.memory_space<vmem>>, %arg2: memref<144x128xbf16, #tpu.memory_space<vmem>>, %arg3: memref<1x128xf32, #tpu.memory_space<vmem>>, %arg4: memref<128x128xbf16, #tpu.memory_space<vmem>>) attributes {dimension_semantics = [#tpu.dimension_semantics<parallel>], iteration_bounds = array<i64: 1>, scalar_prefetch = 0 : i64, scratch_operands = 0 : i64, tpu.core_type = #tpu.core_type<tc>, window_params = [{transform_indices = @transform_0, window_bounds = array<i64: 128, 144>}, {pipeline_mode = #tpu.pipeline_mode<synchronous>, transform_indices = @transform_1, window_bounds = array<i64: 144, 128>}, {pipeline_mode = #tpu.pipeline_mode<synchronous>, transform_indices = @transform_2, window_bounds = array<i64: 1, 128>}, {transform_indices = @transform_3, window_bounds = array<i64: 128, 128>}]} {
    %c0 = arith.constant 0 : index
    %c0_0 = arith.constant 0 : index
    %0 = vector.load %arg1[%c0, %c0_0] : memref<128x144xbf16, #tpu.memory_space<vmem>>, vector<128x144xbf16>
    %c0_1 = arith.constant 0 : index
    %c0_2 = arith.constant 0 : index
    %1 = vector.load %arg2[%c0_1, %c0_2] : memref<144x128xbf16, #tpu.memory_space<vmem>>, vector<144x128xbf16>
    %cst = arith.constant dense<0.000000e+00> : vector<128x128xf32>
    %2 = tpu.matmul %0, %1, %cst {dimension_numbers = #tpu.dot_dimension_numbers<[1], [0], [0], [1], [0, 0, 1, 1], [], []>} : vector<128x144xbf16>, vector<144x128xbf16>, vector<128x128xf32> -> vector<128x128xf32>
    %c0_3 = arith.constant 0 : index
    %c0_4 = arith.constant 0 : index
    %3 = vector.load %arg3[%c0_3, %c0_4] : memref<1x128xf32, #tpu.memory_space<vmem>>, vector<1x128xf32>
    %4 = vector.broadcast %3 : vector<1x128xf32> to vector<128x128xf32>
    %5 = arith.addf %2, %4 : vector<128x128xf32>
    %cst_5 = arith.constant 0.000000e+00 : f32
    %6 = vector.broadcast %cst_5 : f32 to vector<128x128xf32>
    %7 = arith.maximumf %5, %6 : vector<128x128xf32>
    %8 = arith.truncf %7 : vector<128x128xf32> to vector<128x128xbf16>
    %c0_6 = arith.constant 0 : index
    %c0_7 = arith.constant 0 : index
    %9 = vector.load %arg4[%c0_6, %c0_7] : memref<128x128xbf16, #tpu.memory_space<vmem>>, vector<128x128xbf16>
    tpu.vector_store %arg4[%c0_6, %c0_7], %8 {strides = array<i32>} : memref<128x128xbf16, #tpu.memory_space<vmem>>, vector<128x128xbf16>,
    return
  }
  func.func @transform_0(%arg0: i32) -> (i32, i32) {
    %c0_i32 = arith.constant 0 : i32
    %c0_i32_0 = arith.constant 0 : i32
    return %arg0, %c0_i32 : i32, i32
  }
  func.func @transform_1(%arg0: i32) -> (i32, i32) {
    %c0_i32 = arith.constant 0 : i32
    %c0_i32_0 = arith.constant 0 : i32
    %c0_i32_1 = arith.constant 0 : i32
    return %c0_i32, %c0_i32_0 : i32, i32
  }
  func.func @transform_2(%arg0: i32) -> (i32, i32) {
    %c0_i32 = arith.constant 0 : i32
    %c0_i32_0 = arith.constant 0 : i32
    %c0_i32_1 = arith.constant 0 : i32
    return %c0_i32, %c0_i32_0 : i32, i32
  }
  func.func @transform_3(%arg0: i32) -> (i32, i32) {
    %c0_i32 = arith.constant 0 : i32
    %c0_i32_0 = arith.constant 0 : i32
    return %arg0, %c0_i32 : i32, i32
  }
}

</mosaic_0001>

<llo_original>
// kernel: _forward.3
$region0: #{_forward.3}
  #allocation0 [shape = 'u32[]', space=smem, size = 0x4, offset = 0x4, fixed_abs, tag = 'smem constant byte address 0x4 - core index']
  #allocation1 [shape = 'u32[144,128]{1,0:T(1,128)}', space=vmem, size = 0x12000, scoped, tag = 'internal scratch']
  %s0 = inlined_call_operand.vmem [shape: bf16[512,32], index: 0, kind: input, shape index: {}]
  %s1 = inlined_call_operand.vmem [shape: bf16[32,128], index: 1, kind: input, shape index: {}]
  %s2 = inlined_call_operand.vmem [shape: f32[1,128], index: 2, kind: input, shape index: {}]
  %s3 = inlined_call_operand.vmem [shape: bf16[512,128], index: 3, kind: output, shape index: {}]
  %s4 = sld [smem:[#allocation0]]
  $region45: #{_forward.3} parent=0
    _
  %s6 = ssub.s32 1, %s4
  %s7 = scalar_select 0, %s6, %s4
  loop: start=0, step=1, limit=4
  $region2: #{_forward.3} parent=0 // loop_pre_header
    _
  $region3: #{_forward.3} parent=0 // loop_header
    %s9 = sphi 0, %s13
    %p10 = scmp.ge.s32.totalorder %s9, 4
    %s19 = sphi 0, %s21
    %s22 = sphi 0, %s19
    %s23 = sphi 0, %s22
    %s39 = sphi 0, %s23
    %s43 = sphi 0, %s43
    %s45 = sphi 0, %s43
    %s46 = sphi 0, %s45
    %s60 = sphi 0, %s46
    %s64 = sphi 0, %s64
    %s66 = sphi 0, %s64
    %s67 = sphi 0, %s66
    %s81 = sphi 0, %s67
    %s87 = sphi 0, %s89
    %s90 = sphi 0, %s87
    %s91 = sphi 0, %s90
    %s107 = sphi 0, %s91
  $region4: #{_forward.3} parent=0 // loop_header_branch
    %12 = sbr.rel (%p10) target = $region8
  $region5: #{_forward.3} parent=0 // loop_body
    %s14 = ssub.s32 %s9, 1
    %s15 = ssub.s32 %s9, 2
    %s16 = sadd.s32 %s9, 1
    %s17 = ssub.s32 %s9, %s16
    %p18 = scmp.eq.s32.totalorder %s17, 0
    %s20 = sadd.s32 %s19, 1
    %s21 = scalar_select %p18, %s19, %s20
    %p24 = pneg %p18
    %p25 = scmp.eq.s32.totalorder %s9, 1
    %p26 = por %p24, %p25
    %p27 = scmp.ne.s32.totalorder %s19, %s22
    %p28 = scmp.eq.s32.totalorder %s9, 0
    %p29 = por %p27, %p28
    %p30 = scmp.ne.s32.totalorder %s19, %s22
    %p31 = scmp.eq.s32.totalorder %s14, 1
    %p32 = por %p30, %p31
    %p33 = scmp.ne.s32.totalorder %s22, %s23
    %p34 = scmp.eq.s32.totalorder %s14, 0
    %p35 = por %p33, %p34
    %p36 = scmp.ne.s32.totalorder %s22, %s23
    %p37 = scmp.eq.s32.totalorder %s15, 1
    %p38 = por %p36, %p37
    %p40 = scmp.ne.s32.totalorder %s23, %s39
    %p41 = scmp.eq.s32.totalorder %s15, 0
    %p42 = por %p40, %p41
    %s44 = sadd.s32 %s43, 1
    %p47 = scmp.eq.s32.totalorder %s9, 1
    %p48 = scmp.ne.s32.totalorder %s43, %s45
    %p49 = scmp.eq.s32.totalorder %s9, 0
    %p50 = por %p48, %p49
    %p51 = scmp.ne.s32.totalorder %s43, %s45
    %p52 = scmp.eq.s32.totalorder %s14, 1
    %p53 = por %p51, %p52
    %p54 = scmp.ne.s32.totalorder %s45, %s46
    %p55 = scmp.eq.s32.totalorder %s14, 0
    %p56 = por %p54, %p55
    %p57 = scmp.ne.s32.totalorder %s45, %s46
    %p58 = scmp.eq.s32.totalorder %s15, 1
    %p59 = por %p57, %p58
    %p61 = scmp.ne.s32.totalorder %s46, %s60
    %p62 = scmp.eq.s32.totalorder %s15, 0
    %p63 = por %p61, %p62
    %s65 = sadd.s32 %s64, 1
    %p68 = scmp.eq.s32.totalorder %s9, 1
    %p69 = scmp.ne.s32.totalorder %s64, %s66
    %p70 = scmp.eq.s32.totalorder %s9, 0
    %p71 = por %p69, %p70
    %p72 = scmp.ne.s32.totalorder %s64, %s66
    %p73 = scmp.eq.s32.totalorder %s14, 1
    %p74 = por %p72, %p73
    %p75 = scmp.ne.s32.totalorder %s66, %s67
    %p76 = scmp.eq.s32.totalorder %s14, 0
    %p77 = por %p75, %p76
    %p78 = scmp.ne.s32.totalorder %s66, %s67
    %p79 = scmp.eq.s32.totalorder %s15, 1
    %p80 = por %p78, %p79
    %p82 = scmp.ne.s32.totalorder %s67, %s81
    %p83 = scmp.eq.s32.totalorder %s15, 0
    %p84 = por %p82, %p83
    %s85 = ssub.s32 %s9, %s16
    %p86 = scmp.eq.s32.totalorder %s85, 0
    %s88 = sadd.s32 %s87, 1
    %s89 = scalar_select %p86, %s87, %s88
    %p92 = pneg %p86
    %p93 = scmp.eq.s32.totalorder %s9, 1
    %p94 = por %p92, %p93
    %p95 = scmp.ne.s32.totalorder %s87, %s90
    %p96 = scmp.eq.s32.totalorder %s9, 0
    %p97 = por %p95, %p96
    %p98 = scmp.ne.s32.totalorder %s87, %s90
    %p99 = scmp.eq.s32.totalorder %s14, 1
    %p100 = por %p98, %p99
    %p101 = scmp.ne.s32.totalorder %s90, %s91
    %p102 = scmp.eq.s32.totalorder %s14, 0
    %p103 = por %p101, %p102
    %p104 = scmp.ne.s32.totalorder %s90, %s91
    %p105 = scmp.eq.s32.totalorder %s15, 1
    %p106 = por %p104, %p105
    %p108 = scmp.ne.s32.totalorder %s91, %s107
    %p109 = scmp.eq.s32.totalorder %s15, 0
    %p110 = por %p108, %p109
    %p111 = scmp.le.s32.totalorder 1, %s9
    %p112 = scmp.lt.s32.totalorder %s9, 3
    %p113 = pnand %p111, %p112
    %p114 = pneg %p113
    // Predicated region
    $region9: #{_forward.3} parent=5 // pred_check
      _
    $region10: #{_forward.3} parent=5 // pred_check_branch
      %116 = sbr.rel (%p113) target = $region12
    $region11: #{_forward.3} parent=5 // pred_region
      %s117 = ssub.s32 %s9, 1
      // Predicated region
      $region13: #{_forward.3} parent=11 // pred_check
        %p118 = pneg %p56
      $region14: #{_forward.3} parent=11 // pred_check_branch
        %120 = sbr.rel (%p118) target = $region16
      $region15: #{_forward.3} parent=11 // pred_region
        _
      $region16: #{_forward.3} parent=11 // pred_fallthru
        _
      // Predicated region
      $region17: #{_forward.3} parent=11 // pred_check
        %p121 = pneg %p77
      $region18: #{_forward.3} parent=11 // pred_check_branch
        %123 = sbr.rel (%p121) target = $region20
      $region19: #{_forward.3} parent=11 // pred_region
        _
      $region20: #{_forward.3} parent=11 // pred_fallthru
        _
    $region12: #{_forward.3} parent=5 // pred_fallthru
      _
    %p124 = scmp.lt.s32.totalorder %s9, 2
    // Predicated region
    $region21: #{_forward.3} parent=5 // pred_check
      %p125 = pneg %p124
    $region22: #{_forward.3} parent=5 // pred_check_branch
      %127 = sbr.rel (%p125) target = $region24
    $region23: #{_forward.3} parent=5 // pred_region
      // Predicated region
      $region25: #{_forward.3} parent=23 // pred_check
        %p128 = pneg %p29
      $region26: #{_forward.3} parent=23 // pred_check_branch
        %130 = sbr.rel (%p128) target = $region28
      $region27: #{_forward.3} parent=23 // pred_region
        %s131 = smul.u32 32, %s9
        %p132 = scmp.lt.s32.totalorder %s131, 63
        %s133 = scalar_select %p132, %s131, 63
        %s134 = smul.addr %s133, 4
        %s135 = scalar_lea.vmem %s0, %s134
        %s136 = smul.u32 32, %s9
      $region28: #{_forward.3} parent=23 // pred_fallthru
        _
    $region24: #{_forward.3} parent=5 // pred_fallthru
      _
    %p137 = scmp.le.s32.totalorder 1, %s9
    %p138 = scmp.lt.s32.totalorder %s9, 3
    %p139 = pnand %p137, %p138
    %p140 = pneg %p139
    // Predicated region
    $region29: #{_forward.3} parent=5 // pred_check
      _
    $region30: #{_forward.3} parent=5 // pred_check_branch
      %142 = sbr.rel (%p139) target = $region32
    $region31: #{_forward.3} parent=5 // pred_region
      %s143 = ssub.s32 %s9, 1
      %s144 = smul.u32 32, %s14
      %p145 = scmp.lt.s32.totalorder %s144, 63
      %s146 = scalar_select %p145, %s144, 63
      %s147 = smul.addr %s146, 4
      %s148 = scalar_lea.vmem %s0, %s147
      %p149 = pneg %p35
      %p150 = pneg %p32
      %p151 = pneg %p56
      %p152 = pneg %p53
      %p153 = pneg %p77
      %p154 = pneg %p74
      %p155 = pneg %p103
      %p156 = pneg %p100
      %s157 = smul.u32 32, %s14
      %p158 = scmp.lt.s32.totalorder %s157, 63
      %s159 = scalar_select %p158, %s157, 63
      %s160 = smul.addr %s159, 4
      %s161 = scalar_lea.vmem %s3, %s160
      %s162 = smul.u32 32, %s14
      %p163 = scmp.lt.s32.totalorder %s162, 63
      %s164 = scalar_select %p163, %s162, 63
      %s165 = smul.addr %s164, 4
      %s166 = scalar_lea.vmem %s0, %s165
      %s167 = smul.u32 32, %s14
      %s168 = smul.u32 32, %s14
      %p169 = scmp.lt.s32.totalorder %s168, 63
      %s170 = scalar_select %p169, %s168, 63
      %s171 = smul.addr %s170, 4
      %s172 = scalar_lea.vmem %s3, %s171
      %s173 = smul.u32 32, %s14
      %v175 = vld [vmem:[%s166] sm:$0xf]
      %v176 = vld [vmem:[%s166 + $0x4] sm:$0xf]
      %v177 = vld [vmem:[%s166 + $0x8] sm:$0xf]
      %v178 = vld [vmem:[%s166 + $0xc] sm:$0xf]
      %v179 = vld [vmem:[%s166 + $0x10] sm:$0xf]
      %v180 = vld [vmem:[%s166 + $0x14] sm:$0xf]
      %v181 = vld [vmem:[%s166 + $0x18] sm:$0xf]
      %v182 = vld [vmem:[%s166 + $0x1c] sm:$0xf]
      %v183 = vld [vmem:[%s166 + $0x20] sm:$0xf]
      %v184 = vld [vmem:[%s166 + $0x24] sm:$0xf]
      %v185 = vld [vmem:[%s166 + $0x28] sm:$0xf]
      %v186 = vld [vmem:[%s166 + $0x2c] sm:$0xf]
      %v187 = vld [vmem:[%s166 + $0x30] sm:$0xf]
      %v188 = vld [vmem:[%s166 + $0x34] sm:$0xf]
      %v189 = vld [vmem:[%s166 + $0x38] sm:$0xf]
      %v190 = vld [vmem:[%s166 + $0x3c] sm:$0xf]
      %v191 = vld [vmem:[%s166 + $0x40] sm:$0xf]
      %v192 = vld [vmem:[%s166 + $0x44] sm:$0xf]
      %v193 = vld [vmem:[%s166 + $0x48] sm:$0xf]
      %v194 = vld [vmem:[%s166 + $0x4c] sm:$0xf]
      %v195 = vld [vmem:[%s166 + $0x50] sm:$0xf]
      %v196 = vld [vmem:[%s166 + $0x54] sm:$0xf]
      %v197 = vld [vmem:[%s166 + $0x58] sm:$0xf]
      %v198 = vld [vmem:[%s166 + $0x5c] sm:$0xf]
      %v199 = vld [vmem:[%s166 + $0x60] sm:$0xf]
      %v200 = vld [vmem:[%s166 + $0x64] sm:$0xf]
      %v201 = vld [vmem:[%s166 + $0x68] sm:$0xf]
      %v202 = vld [vmem:[%s166 + $0x6c] sm:$0xf]
      %v203 = vld [vmem:[%s166 + $0x70] sm:$0xf]
      %v204 = vld [vmem:[%s166 + $0x74] sm:$0xf]
      %v205 = vld [vmem:[%s166 + $0x78] sm:$0xf]
      %v206 = vld [vmem:[%s166 + $0x7c] sm:$0xf]
      %v207 = vld [vmem:[%s1] sm:$0xf]
      %v208 = vld [vmem:[%s1 + $0x4] sm:$0xf]
      %v209 = vld [vmem:[%s1 + $0x8] sm:$0xf]
      %v210 = vld [vmem:[%s1 + $0xc] sm:$0xf]
      %v211 = vld [vmem:[%s2] sm:$0x1]
      %v213 = vlaneseq
      %v214 = vshrl.u32 %v213, 7
      %v215 = vsub.s32 0, %v214
      %v216 = vrot.slane %v211, %v215
      %v250 = vunpack.c.l.b16 %v175
      %v251 = vunpack.c.l.b16 %v176
      %v252 = vunpack.c.l.b16 %v177
      %v253 = vunpack.c.l.b16 %v178
      %v254 = vunpack.c.l.b16 %v179
      %v255 = vunpack.c.l.b16 %v180
      %v256 = vunpack.c.l.b16 %v181
      %v257 = vunpack.c.l.b16 %v182
      %v258 = vunpack.c.l.b16 %v183
      %v259 = vunpack.c.l.b16 %v184
      %v260 = vunpack.c.l.b16 %v185
      %v261 = vunpack.c.l.b16 %v186
      %v262 = vunpack.c.l.b16 %v187
      %v263 = vunpack.c.l.b16 %v188
      %v264 = vunpack.c.l.b16 %v189
      %v265 = vunpack.c.l.b16 %v190
      %v266 = vunpack.c.l.b16 %v191
      %v267 = vunpack.c.l.b16 %v192
      %v268 = vunpack.c.l.b16 %v193
      %v269 = vunpack.c.l.b16 %v194
      %v270 = vunpack.c.l.b16 %v195
      %v271 = vunpack.c.l.b16 %v196
      %v272 = vunpack.c.l.b16 %v197
      %v273 = vunpack.c.l.b16 %v198
      %v274 = vunpack.c.l.b16 %v199
      %v275 = vunpack.c.l.b16 %v200
      %v276 = vunpack.c.l.b16 %v201
      %v277 = vunpack.c.l.b16 %v202
      %v278 = vunpack.c.l.b16 %v203
      %v279 = vunpack.c.l.b16 %v204
      %v280 = vunpack.c.l.b16 %v205
      %v281 = vunpack.c.l.b16 %v206
      %v282 = vpack.c.b16 %v251, %v250
      %v283 = vpack.c.b16 %v253, %v252
      %v284 = vpack.c.b16 %v255, %v254
      %v285 = vpack.c.b16 %v257, %v256
      %v286 = vpack.c.b16 %v259, %v258
      %v287 = vpack.c.b16 %v261, %v260
      %v288 = vpack.c.b16 %v263, %v262
      %v289 = vpack.c.b16 %v265, %v264
      %v290 = vpack.c.b16 %v267, %v266
      %v291 = vpack.c.b16 %v269, %v268
      %v292 = vpack.c.b16 %v271, %v270
      %v293 = vpack.c.b16 %v273, %v272
      %v294 = vpack.c.b16 %v275, %v274
      %v295 = vpack.c.b16 %v277, %v276
      %v296 = vpack.c.b16 %v279, %v278
      %v297 = vpack.c.b16 %v281, %v280
      %v302 = vunpack.c.l.b16 %v207
      %v303 = vunpack.c.l.b16 %v208
      %v304 = vunpack.c.l.b16 %v209
      %v305 = vunpack.c.l.b16 %v210
      %v306 = vpack.c.b16 %v303, %v302
      %v307 = vpack.c.b16 %v305, %v304
      %vm310 = vcmask 261120
      %v312 = vsel %vm310, %v282, 0
      %v315 = vsel %vm310, %v283, 0
      %v318 = vsel %vm310, %v284, 0
      %v321 = vsel %vm310, %v285, 0
      %v324 = vsel %vm310, %v286, 0
      %v327 = vsel %vm310, %v287, 0
      %v330 = vsel %vm310, %v288, 0
      %v333 = vsel %vm310, %v289, 0
      %v336 = vsel %vm310, %v290, 0
      %v339 = vsel %vm310, %v291, 0
      %v342 = vsel %vm310, %v292, 0
      %v345 = vsel %vm310, %v293, 0
      %v348 = vsel %vm310, %v294, 0
      %v351 = vsel %vm310, %v295, 0
      %v354 = vsel %vm310, %v296, 0
      %v357 = vsel %vm310, %v297, 0
      %359 = vmatprep.subr.bf16.mxu0 0
      %360 = vmatpush1.bf16.msra.mxu0 0
      %361 = vmatprep.subr.bf16.mxu0 0
      %362 = vmatpush1.bf16.msra.mxu0 0
      %363 = vmatprep.subr.bf16.mxu0 0
      %364 = vmatpush1.bf16.msra.mxu0 0
      %365 = vmatprep.subr.bf16.mxu0 0
      %366 = vmatpush1.bf16.msra.mxu0 0
      %367 = vmatprep.subr.bf16.mxu0 0
      %368 = vmatpush1.bf16.msra.mxu0 0
      %369 = vmatprep.subr.bf16.mxu0 0
      %370 = vmatpush1.bf16.msra.mxu0 0
      %371 = vmatprep.subr.bf16.mxu0 0
      %372 = vmatpush1.bf16.msra.mxu0 %v307
      %373 = vmatprep.subr.bf16.mxu0 0
      %374 = vmatpush1.bf16.msra.mxu0 %v306
      %375 = vmatprep.subr.bf16.mxu0 0
      %376 = vmatpush2.bf16.msra.mxu0 0
      %377 = vmatprep.subr.bf16.mxu0 0
      %378 = vmatpush2.bf16.msra.mxu0 0
      %379 = vmatprep.subr.bf16.mxu0 0
      %380 = vmatpush2.bf16.msra.mxu0 0
      %381 = vmatprep.subr.bf16.mxu0 0
      %382 = vmatpush2.bf16.msra.mxu0 0
      %383 = vmatprep.subr.bf16.mxu0 0
      %384 = vmatpush2.bf16.msra.mxu0 0
      %385 = vmatprep.subr.bf16.mxu0 0
      %386 = vmatpush2.bf16.msra.mxu0 0
      %387 = vmatprep.subr.bf16.mxu0 0
      %388 = vmatpush2.bf16.msra.mxu0 0
      %389 = vmatprep.subr.bf16.mxu0 0
      %390 = vmatpush2.bf16.msra.mxu0 0
      %391 = vmatprep.mubr.bf16.mxu0 0
      %392 = vmatmul.mubr.bf16.gmra.mxu0 %v312
      %v393 = vpop.f32.mrf.mxu0
      %v394 = vadd.f32 %v216, %v393
      %v395 = vpop.f32.mrf.mxu0
      %v396 = vpop.f32.mrf.mxu0
      %v397 = vadd.f32 %v216, %v396
      %v398 = vpop.f32.mrf.mxu0
      %399 = vmatprep.mubr.bf16.mxu0 0
      %400 = vmatmul.mubr.bf16.gmra.mxu0 %v315
      %v401 = vpop.f32.mrf.mxu0
      %v402 = vadd.f32 %v216, %v401
      %v403 = vpop.f32.mrf.mxu0
      %v404 = vpop.f32.mrf.mxu0
      %v405 = vadd.f32 %v216, %v404
      %v406 = vpop.f32.mrf.mxu0
      %407 = vmatprep.mubr.bf16.mxu0 0
      %408 = vmatmul.mubr.bf16.gmra.mxu0 %v318
      %v409 = vpop.f32.mrf.mxu0
      %v410 = vadd.f32 %v216, %v409
      %v411 = vpop.f32.mrf.mxu0
      %v412 = vpop.f32.mrf.mxu0
      %v413 = vadd.f32 %v216, %v412
      %v414 = vpop.f32.mrf.mxu0
      %415 = vmatprep.mubr.bf16.mxu0 0
      %416 = vmatmul.mubr.bf16.gmra.mxu0 %v321
      %v417 = vpop.f32.mrf.mxu0
      %v418 = vadd.f32 %v216, %v417
      %v419 = vpop.f32.mrf.mxu0
      %v420 = vpop.f32.mrf.mxu0
      %v421 = vadd.f32 %v216, %v420
      %v422 = vpop.f32.mrf.mxu0
      %423 = vmatprep.mubr.bf16.mxu0 0
      %424 = vmatmul.mubr.bf16.gmra.mxu0 %v324
      %v425 = vpop.f32.mrf.mxu0
      %v426 = vadd.f32 %v216, %v425
      %v427 = vpop.f32.mrf.mxu0
      %v428 = vpop.f32.mrf.mxu0
      %v429 = vadd.f32 %v216, %v428
      %v430 = vpop.f32.mrf.mxu0
      %431 = vmatprep.mubr.bf16.mxu0 0
      %432 = vmatmul.mubr.bf16.gmra.mxu0 %v327
      %v433 = vpop.f32.mrf.mxu0
      %v434 = vadd.f32 %v216, %v433
      %v435 = vpop.f32.mrf.mxu0
      %v436 = vpop.f32.mrf.mxu0
      %v437 = vadd.f32 %v216, %v436
      %v438 = vpop.f32.mrf.mxu0
      %439 = vmatprep.mubr.bf16.mxu0 0
      %440 = vmatmul.mubr.bf16.gmra.mxu0 %v330
      %v441 = vpop.f32.mrf.mxu0
      %v442 = vadd.f32 %v216, %v441
      %v443 = vpop.f32.mrf.mxu0
      %v444 = vpop.f32.mrf.mxu0
      %v445 = vadd.f32 %v216, %v444
      %v446 = vpop.f32.mrf.mxu0
      %447 = vmatprep.mubr.bf16.mxu0 0
      %448 = vmatmul.mubr.bf16.gmra.mxu0 %v333
      %v449 = vpop.f32.mrf.mxu0
      %v450 = vadd.f32 %v216, %v449
      %v451 = vpop.f32.mrf.mxu0
      %v452 = vpop.f32.mrf.mxu0
      %v453 = vadd.f32 %v216, %v452
      %v454 = vpop.f32.mrf.mxu0
      %455 = vmatprep.mubr.bf16.mxu0 0
      %456 = vmatmul.mubr.bf16.gmra.mxu0 %v336
      %v457 = vpop.f32.mrf.mxu0
      %v458 = vadd.f32 %v216, %v457
      %v459 = vpop.f32.mrf.mxu0
      %v460 = vpop.f32.mrf.mxu0
      %v461 = vadd.f32 %v216, %v460
      %v462 = vpop.f32.mrf.mxu0
      %463 = vmatprep.mubr.bf16.mxu0 0
      %464 = vmatmul.mubr.bf16.gmra.mxu0 %v339
      %v465 = vpop.f32.mrf.mxu0
      %v466 = vadd.f32 %v216, %v465
      %v467 = vpop.f32.mrf.mxu0
      %v468 = vpop.f32.mrf.mxu0
      %v469 = vadd.f32 %v216, %v468
      %v470 = vpop.f32.mrf.mxu0
      %471 = vmatprep.mubr.bf16.mxu0 0
      %472 = vmatmul.mubr.bf16.gmra.mxu0 %v342
      %v473 = vpop.f32.mrf.mxu0
      %v474 = vadd.f32 %v216, %v473
      %v475 = vpop.f32.mrf.mxu0
      %v476 = vpop.f32.mrf.mxu0
      %v477 = vadd.f32 %v216, %v476
      %v478 = vpop.f32.mrf.mxu0
      %479 = vmatprep.mubr.bf16.mxu0 0
      %480 = vmatmul.mubr.bf16.gmra.mxu0 %v345
      %v481 = vpop.f32.mrf.mxu0
      %v482 = vadd.f32 %v216, %v481
      %v483 = vpop.f32.mrf.mxu0
      %v484 = vpop.f32.mrf.mxu0
      %v485 = vadd.f32 %v216, %v484
      %v486 = vpop.f32.mrf.mxu0
      %487 = vmatprep.mubr.bf16.mxu0 0
      %488 = vmatmul.mubr.bf16.gmra.mxu0 %v348
      %v489 = vpop.f32.mrf.mxu0
      %v490 = vadd.f32 %v216, %v489
      %v491 = vpop.f32.mrf.mxu0
      %v492 = vpop.f32.mrf.mxu0
      %v493 = vadd.f32 %v216, %v492
      %v494 = vpop.f32.mrf.mxu0
      %495 = vmatprep.mubr.bf16.mxu0 0
      %496 = vmatmul.mubr.bf16.gmra.mxu0 %v351
      %v497 = vpop.f32.mrf.mxu0
      %v498 = vadd.f32 %v216, %v497
      %v499 = vpop.f32.mrf.mxu0
      %v500 = vpop.f32.mrf.mxu0
      %v501 = vadd.f32 %v216, %v500
      %v502 = vpop.f32.mrf.mxu0
      %503 = vmatprep.mubr.bf16.mxu0 0
      %504 = vmatmul.mubr.bf16.gmra.mxu0 %v354
      %v505 = vpop.f32.mrf.mxu0
      %v506 = vadd.f32 %v216, %v505
      %v507 = vpop.f32.mrf.mxu0
      %v508 = vpop.f32.mrf.mxu0
      %v509 = vadd.f32 %v216, %v508
      %v510 = vpop.f32.mrf.mxu0
      %511 = vmatprep.mubr.bf16.mxu0 0
      %512 = vmatmul.mubr.bf16.gmra.mxu0 %v357
      %v513 = vpop.f32.mrf.mxu0
      %v514 = vadd.f32 %v216, %v513
      %v515 = vpop.f32.mrf.mxu0
      %v516 = vpop.f32.mrf.mxu0
      %v517 = vadd.f32 %v216, %v516
      %v518 = vpop.f32.mrf.mxu0
      %519 = vdwg.mxu0
      %v520 = vmax.f32 %v394, 0.0
      %v521 = vmax.f32 %v397, 0.0
      %v522 = vmax.f32 %v402, 0.0
      %v523 = vmax.f32 %v405, 0.0
      %v524 = vmax.f32 %v410, 0.0
      %v525 = vmax.f32 %v413, 0.0
      %v526 = vmax.f32 %v418, 0.0
      %v527 = vmax.f32 %v421, 0.0
      %v528 = vmax.f32 %v426, 0.0
      %v529 = vmax.f32 %v429, 0.0
      %v530 = vmax.f32 %v434, 0.0
      %v531 = vmax.f32 %v437, 0.0
      %v532 = vmax.f32 %v442, 0.0
      %v533 = vmax.f32 %v445, 0.0
      %v534 = vmax.f32 %v450, 0.0
      %v535 = vmax.f32 %v453, 0.0
      %v536 = vmax.f32 %v458, 0.0
      %v537 = vmax.f32 %v461, 0.0
      %v538 = vmax.f32 %v466, 0.0
      %v539 = vmax.f32 %v469, 0.0
      %v540 = vmax.f32 %v474, 0.0
      %v541 = vmax.f32 %v477, 0.0
      %v542 = vmax.f32 %v482, 0.0
      %v543 = vmax.f32 %v485, 0.0
      %v544 = vmax.f32 %v490, 0.0
      %v545 = vmax.f32 %v493, 0.0
      %v546 = vmax.f32 %v498, 0.0
      %v547 = vmax.f32 %v501, 0.0
      %v548 = vmax.f32 %v506, 0.0
      %v549 = vmax.f32 %v509, 0.0
      %v550 = vmax.f32 %v514, 0.0
      %v551 = vmax.f32 %v517, 0.0
      %v552 = vpack.c.bf16 %v521, %v520
      %v553 = vpack.c.bf16 %v523, %v522
      %v554 = vpack.c.bf16 %v525, %v524
      %v555 = vpack.c.bf16 %v527, %v526
      %v556 = vpack.c.bf16 %v529, %v528
      %v557 = vpack.c.bf16 %v531, %v530
      %v558 = vpack.c.bf16 %v533, %v532
      %v559 = vpack.c.bf16 %v535, %v534
      %v560 = vpack.c.bf16 %v537, %v536
      %v561 = vpack.c.bf16 %v539, %v538
      %v562 = vpack.c.bf16 %v541, %v540
      %v563 = vpack.c.bf16 %v543, %v542
      %v564 = vpack.c.bf16 %v545, %v544
      %v565 = vpack.c.bf16 %v547, %v546
      %v566 = vpack.c.bf16 %v549, %v548
      %v567 = vpack.c.bf16 %v551, %v550
      %v584 = vunpack.c.l.b16 %v552
      %v585 = vunpack.c.h.b16 %v552
      %v586 = vunpack.c.l.b16 %v553
      %v587 = vunpack.c.h.b16 %v553
      %v588 = vunpack.c.l.b16 %v554
      %v589 = vunpack.c.h.b16 %v554
      %v590 = vunpack.c.l.b16 %v555
      %v591 = vunpack.c.h.b16 %v555
      %v592 = vunpack.c.l.b16 %v556
      %v593 = vunpack.c.h.b16 %v556
      %v594 = vunpack.c.l.b16 %v557
      %v595 = vunpack.c.h.b16 %v557
      %v596 = vunpack.c.l.b16 %v558
      %v597 = vunpack.c.h.b16 %v558
      %v598 = vunpack.c.l.b16 %v559
      %v599 = vunpack.c.h.b16 %v559
      %v600 = vunpack.c.l.b16 %v560
      %v601 = vunpack.c.h.b16 %v560
      %v602 = vunpack.c.l.b16 %v561
      %v603 = vunpack.c.h.b16 %v561
      %v604 = vunpack.c.l.b16 %v562
      %v605 = vunpack.c.h.b16 %v562
      %v606 = vunpack.c.l.b16 %v563
      %v607 = vunpack.c.h.b16 %v563
      %v608 = vunpack.c.l.b16 %v564
      %v609 = vunpack.c.h.b16 %v564
      %v610 = vunpack.c.l.b16 %v565
      %v611 = vunpack.c.h.b16 %v565
      %v612 = vunpack.c.l.b16 %v566
      %v613 = vunpack.c.h.b16 %v566
      %v614 = vunpack.c.l.b16 %v567
      %v615 = vunpack.c.h.b16 %v567
      %v616 = vpack.c.b16 %v584, %v584
      %v617 = vpack.c.b16 %v585, %v585
      %v618 = vpack.c.b16 %v586, %v586
      %v619 = vpack.c.b16 %v587, %v587
      %v620 = vpack.c.b16 %v588, %v588
      %v621 = vpack.c.b16 %v589, %v589
      %v622 = vpack.c.b16 %v590, %v590
      %v623 = vpack.c.b16 %v591, %v591
      %v624 = vpack.c.b16 %v592, %v592
      %v625 = vpack.c.b16 %v593, %v593
      %v626 = vpack.c.b16 %v594, %v594
      %v627 = vpack.c.b16 %v595, %v595
      %v628 = vpack.c.b16 %v596, %v596
      %v629 = vpack.c.b16 %v597, %v597
      %v630 = vpack.c.b16 %v598, %v598
      %v631 = vpack.c.b16 %v599, %v599
      %v632 = vpack.c.b16 %v600, %v600
      %v633 = vpack.c.b16 %v601, %v601
      %v634 = vpack.c.b16 %v602, %v602
      %v635 = vpack.c.b16 %v603, %v603
      %v636 = vpack.c.b16 %v604, %v604
      %v637 = vpack.c.b16 %v605, %v605
      %v638 = vpack.c.b16 %v606, %v606
      %v639 = vpack.c.b16 %v607, %v607
      %v640 = vpack.c.b16 %v608, %v608
      %v641 = vpack.c.b16 %v609, %v609
      %v642 = vpack.c.b16 %v610, %v610
      %v643 = vpack.c.b16 %v611, %v611
      %v644 = vpack.c.b16 %v612, %v612
      %v645 = vpack.c.b16 %v613, %v613
      %v646 = vpack.c.b16 %v614, %v614
      %v647 = vpack.c.b16 %v615, %v615
      %680 = vst [vmem:[%s172] sm:$0xf] %v616
      %681 = vst [vmem:[%s172 + $0x4] sm:$0xf] %v617
      %682 = vst [vmem:[%s172 + $0x8] sm:$0xf] %v618
      %683 = vst [vmem:[%s172 + $0xc] sm:$0xf] %v619
      %684 = vst [vmem:[%s172 + $0x10] sm:$0xf] %v620
      %685 = vst [vmem:[%s172 + $0x14] sm:$0xf] %v621
      %686 = vst [vmem:[%s172 + $0x18] sm:$0xf] %v622
      %687 = vst [vmem:[%s172 + $0x1c] sm:$0xf] %v623
      %688 = vst [vmem:[%s172 + $0x20] sm:$0xf] %v624
      %689 = vst [vmem:[%s172 + $0x24] sm:$0xf] %v625
      %690 = vst [vmem:[%s172 + $0x28] sm:$0xf] %v626
      %691 = vst [vmem:[%s172 + $0x2c] sm:$0xf] %v627
      %692 = vst [vmem:[%s172 + $0x30] sm:$0xf] %v628
      %693 = vst [vmem:[%s172 + $0x34] sm:$0xf] %v629
      %694 = vst [vmem:[%s172 + $0x38] sm:$0xf] %v630
      %695 = vst [vmem:[%s172 + $0x3c] sm:$0xf] %v631
      %696 = vst [vmem:[%s172 + $0x40] sm:$0xf] %v632
      %697 = vst [vmem:[%s172 + $0x44] sm:$0xf] %v633
      %698 = vst [vmem:[%s172 + $0x48] sm:$0xf] %v634
      %699 = vst [vmem:[%s172 + $0x4c] sm:$0xf] %v635
      %700 = vst [vmem:[%s172 + $0x50] sm:$0xf] %v636
      %701 = vst [vmem:[%s172 + $0x54] sm:$0xf] %v637
      %702 = vst [vmem:[%s172 + $0x58] sm:$0xf] %v638
      %703 = vst [vmem:[%s172 + $0x5c] sm:$0xf] %v639
      %704 = vst [vmem:[%s172 + $0x60] sm:$0xf] %v640
      %705 = vst [vmem:[%s172 + $0x64] sm:$0xf] %v641
      %706 = vst [vmem:[%s172 + $0x68] sm:$0xf] %v642
      %707 = vst [vmem:[%s172 + $0x6c] sm:$0xf] %v643
      %708 = vst [vmem:[%s172 + $0x70] sm:$0xf] %v644
      %709 = vst [vmem:[%s172 + $0x74] sm:$0xf] %v645
      %710 = vst [vmem:[%s172 + $0x78] sm:$0xf] %v646
      %711 = vst [vmem:[%s172 + $0x7c] sm:$0xf] %v647
      %s712 = smul.u32 32, %s14
      %p713 = scmp.lt.s32.totalorder %s712, 63
      %s714 = scalar_select %p713, %s712, 63
      %s715 = smul.addr %s714, 4
      %s716 = scalar_lea.vmem %s3, %s715
      // Predicated region
      $region33: #{_forward.3} parent=31 // pred_check
        %p717 = pneg %p100
      $region34: #{_forward.3} parent=31 // pred_check_branch
        %719 = sbr.rel (%p717) target = $region36
      $region35: #{_forward.3} parent=31 // pred_region
        %s720 = smul.u32 32, %s14
      $region36: #{_forward.3} parent=31 // pred_fallthru
        _
    $region32: #{_forward.3} parent=5 // pred_fallthru
      _
    %p721 = scmp.le.s32.totalorder 2, %s9
    // Predicated region
    $region37: #{_forward.3} parent=5 // pred_check
      %p722 = pneg %p721
    $region38: #{_forward.3} parent=5 // pred_check_branch
      %724 = sbr.rel (%p722) target = $region40
    $region39: #{_forward.3} parent=5 // pred_region
      %s725 = ssub.s32 %s9, 2
      // Predicated region
      $region41: #{_forward.3} parent=39 // pred_check
        %p726 = pneg %p106
      $region42: #{_forward.3} parent=39 // pred_check_branch
        %728 = sbr.rel (%p726) target = $region44
      $region43: #{_forward.3} parent=39 // pred_region
        %s729 = smul.u32 32, %s15
        %p730 = scmp.lt.s32.totalorder %s729, 63
        %s731 = scalar_select %p730, %s729, 63
        %s732 = smul.addr %s731, 4
        %s733 = scalar_lea.vmem %s3, %s732
      $region44: #{_forward.3} parent=39 // pred_fallthru
        _
    $region40: #{_forward.3} parent=5 // pred_fallthru
      _
  $region6: #{_forward.3} parent=0 // loop_footer
    %s13 = sadd.s32 1, %s9
  $region7: #{_forward.3} parent=0 // loop_footer_branch
    %8 = sbr.rel target = $region3
  $region8: #{_forward.3} parent=0 // loop_exit
    _

// kernel: _forward.4
$region0: #{_forward.4}
  #allocation0 [shape = 'u32[]', space=smem, size = 0x4, offset = 0x4, fixed_abs, tag = 'smem constant byte address 0x4 - core index']
  #allocation1 [shape = 'u32[144,128]{1,0:T(1,128)}', space=vmem, size = 0x12000, scoped, tag = 'internal scratch']
  %s0 = inlined_call_operand.vmem [shape: bf16[512,80], index: 0, kind: input, shape index: {}]
  %s1 = inlined_call_operand.vmem [shape: bf16[80,128], index: 1, kind: input, shape index: {}]
  %s2 = inlined_call_operand.vmem [shape: f32[1,128], index: 2, kind: input, shape index: {}]
  %s3 = inlined_call_operand.vmem [shape: bf16[512,128], index: 3, kind: output, shape index: {}]
  %s4 = sld [smem:[#allocation0]]
  $region45: #{_forward.4} parent=0
    _
  %s6 = ssub.s32 1, %s4
  %s7 = scalar_select 0, %s6, %s4
  loop: start=0, step=1, limit=4
  $region2: #{_forward.4} parent=0 // loop_pre_header
    _
  $region3: #{_forward.4} parent=0 // loop_header
    %s9 = sphi 0, %s13
    %p10 = scmp.ge.s32.totalorder %s9, 4
    %s19 = sphi 0, %s21
    %s22 = sphi 0, %s19
    %s23 = sphi 0, %s22
    %s39 = sphi 0, %s23
    %s43 = sphi 0, %s43
    %s45 = sphi 0, %s43
    %s46 = sphi 0, %s45
    %s60 = sphi 0, %s46
    %s64 = sphi 0, %s64
    %s66 = sphi 0, %s64
    %s67 = sphi 0, %s66
    %s81 = sphi 0, %s67
    %s87 = sphi 0, %s89
    %s90 = sphi 0, %s87
    %s91 = sphi 0, %s90
    %s107 = sphi 0, %s91
  $region4: #{_forward.4} parent=0 // loop_header_branch
    %12 = sbr.rel (%p10) target = $region8
  $region5: #{_forward.4} parent=0 // loop_body
    %s14 = ssub.s32 %s9, 1
    %s15 = ssub.s32 %s9, 2
    %s16 = sadd.s32 %s9, 1
    %s17 = ssub.s32 %s9, %s16
    %p18 = scmp.eq.s32.totalorder %s17, 0
    %s20 = sadd.s32 %s19, 1
    %s21 = scalar_select %p18, %s19, %s20
    %p24 = pneg %p18
    %p25 = scmp.eq.s32.totalorder %s9, 1
    %p26 = por %p24, %p25
    %p27 = scmp.ne.s32.totalorder %s19, %s22
    %p28 = scmp.eq.s32.totalorder %s9, 0
    %p29 = por %p27, %p28
    %p30 = scmp.ne.s32.totalorder %s19, %s22
    %p31 = scmp.eq.s32.totalorder %s14, 1
    %p32 = por %p30, %p31
    %p33 = scmp.ne.s32.totalorder %s22, %s23
    %p34 = scmp.eq.s32.totalorder %s14, 0
    %p35 = por %p33, %p34
    %p36 = scmp.ne.s32.totalorder %s22, %s23
    %p37 = scmp.eq.s32.totalorder %s15, 1
    %p38 = por %p36, %p37
    %p40 = scmp.ne.s32.totalorder %s23, %s39
    %p41 = scmp.eq.s32.totalorder %s15, 0
    %p42 = por %p40, %p41
    %s44 = sadd.s32 %s43, 1
    %p47 = scmp.eq.s32.totalorder %s9, 1
    %p48 = scmp.ne.s32.totalorder %s43, %s45
    %p49 = scmp.eq.s32.totalorder %s9, 0
    %p50 = por %p48, %p49
    %p51 = scmp.ne.s32.totalorder %s43, %s45
    %p52 = scmp.eq.s32.totalorder %s14, 1
    %p53 = por %p51, %p52
    %p54 = scmp.ne.s32.totalorder %s45, %s46
    %p55 = scmp.eq.s32.totalorder %s14, 0
    %p56 = por %p54, %p55
    %p57 = scmp.ne.s32.totalorder %s45, %s46
    %p58 = scmp.eq.s32.totalorder %s15, 1
    %p59 = por %p57, %p58
    %p61 = scmp.ne.s32.totalorder %s46, %s60
    %p62 = scmp.eq.s32.totalorder %s15, 0
    %p63 = por %p61, %p62
    %s65 = sadd.s32 %s64, 1
    %p68 = scmp.eq.s32.totalorder %s9, 1
    %p69 = scmp.ne.s32.totalorder %s64, %s66
    %p70 = scmp.eq.s32.totalorder %s9, 0
    %p71 = por %p69, %p70
    %p72 = scmp.ne.s32.totalorder %s64, %s66
    %p73 = scmp.eq.s32.totalorder %s14, 1
    %p74 = por %p72, %p73
    %p75 = scmp.ne.s32.totalorder %s66, %s67
    %p76 = scmp.eq.s32.totalorder %s14, 0
    %p77 = por %p75, %p76
    %p78 = scmp.ne.s32.totalorder %s66, %s67
    %p79 = scmp.eq.s32.totalorder %s15, 1
    %p80 = por %p78, %p79
    %p82 = scmp.ne.s32.totalorder %s67, %s81
    %p83 = scmp.eq.s32.totalorder %s15, 0
    %p84 = por %p82, %p83
    %s85 = ssub.s32 %s9, %s16
    %p86 = scmp.eq.s32.totalorder %s85, 0
    %s88 = sadd.s32 %s87, 1
    %s89 = scalar_select %p86, %s87, %s88
    %p92 = pneg %p86
    %p93 = scmp.eq.s32.totalorder %s9, 1
    %p94 = por %p92, %p93
    %p95 = scmp.ne.s32.totalorder %s87, %s90
    %p96 = scmp.eq.s32.totalorder %s9, 0
    %p97 = por %p95, %p96
    %p98 = scmp.ne.s32.totalorder %s87, %s90
    %p99 = scmp.eq.s32.totalorder %s14, 1
    %p100 = por %p98, %p99
    %p101 = scmp.ne.s32.totalorder %s90, %s91
    %p102 = scmp.eq.s32.totalorder %s14, 0
    %p103 = por %p101, %p102
    %p104 = scmp.ne.s32.totalorder %s90, %s91
    %p105 = scmp.eq.s32.totalorder %s15, 1
    %p106 = por %p104, %p105
    %p108 = scmp.ne.s32.totalorder %s91, %s107
    %p109 = scmp.eq.s32.totalorder %s15, 0
    %p110 = por %p108, %p109
    %p111 = scmp.le.s32.totalorder 1, %s9
    %p112 = scmp.lt.s32.totalorder %s9, 3
    %p113 = pnand %p111, %p112
    %p114 = pneg %p113
    // Predicated region
    $region9: #{_forward.4} parent=5 // pred_check
      _
    $region10: #{_forward.4} parent=5 // pred_check_branch
      %116 = sbr.rel (%p113) target = $region12
    $region11: #{_forward.4} parent=5 // pred_region
      %s117 = ssub.s32 %s9, 1
      // Predicated region
      $region13: #{_forward.4} parent=11 // pred_check
        %p118 = pneg %p56
      $region14: #{_forward.4} parent=11 // pred_check_branch
        %120 = sbr.rel (%p118) target = $region16
      $region15: #{_forward.4} parent=11 // pred_region
        _
      $region16: #{_forward.4} parent=11 // pred_fallthru
        _
      // Predicated region
      $region17: #{_forward.4} parent=11 // pred_check
        %p121 = pneg %p77
      $region18: #{_forward.4} parent=11 // pred_check_branch
        %123 = sbr.rel (%p121) target = $region20
      $region19: #{_forward.4} parent=11 // pred_region
        _
      $region20: #{_forward.4} parent=11 // pred_fallthru
        _
    $region12: #{_forward.4} parent=5 // pred_fallthru
      _
    %p124 = scmp.lt.s32.totalorder %s9, 2
    // Predicated region
    $region21: #{_forward.4} parent=5 // pred_check
      %p125 = pneg %p124
    $region22: #{_forward.4} parent=5 // pred_check_branch
      %127 = sbr.rel (%p125) target = $region24
    $region23: #{_forward.4} parent=5 // pred_region
      // Predicated region
      $region25: #{_forward.4} parent=23 // pred_check
        %p128 = pneg %p29
      $region26: #{_forward.4} parent=23 // pred_check_branch
        %130 = sbr.rel (%p128) target = $region28
      $region27: #{_forward.4} parent=23 // pred_region
        %s131 = smul.u32 32, %s9
        %p132 = scmp.lt.s32.totalorder %s131, 63
        %s133 = scalar_select %p132, %s131, 63
        %s134 = smul.addr %s133, 4
        %s135 = scalar_lea.vmem %s0, %s134
        %s136 = smul.u32 32, %s9
      $region28: #{_forward.4} parent=23 // pred_fallthru
        _
    $region24: #{_forward.4} parent=5 // pred_fallthru
      _
    %p137 = scmp.le.s32.totalorder 1, %s9
    %p138 = scmp.lt.s32.totalorder %s9, 3
    %p139 = pnand %p137, %p138
    %p140 = pneg %p139
    // Predicated region
    $region29: #{_forward.4} parent=5 // pred_check
      _
    $region30: #{_forward.4} parent=5 // pred_check_branch
      %142 = sbr.rel (%p139) target = $region32
    $region31: #{_forward.4} parent=5 // pred_region
      %s143 = ssub.s32 %s9, 1
      %s144 = smul.u32 32, %s14
      %p145 = scmp.lt.s32.totalorder %s144, 63
      %s146 = scalar_select %p145, %s144, 63
      %s147 = smul.addr %s146, 4
      %s148 = scalar_lea.vmem %s0, %s147
      %p149 = pneg %p35
      %p150 = pneg %p32
      %p151 = pneg %p56
      %p152 = pneg %p53
      %p153 = pneg %p77
      %p154 = pneg %p74
      %p155 = pneg %p103
      %p156 = pneg %p100
      %s157 = smul.u32 32, %s14
      %p158 = scmp.lt.s32.totalorder %s157, 63
      %s159 = scalar_select %p158, %s157, 63
      %s160 = smul.addr %s159, 4
      %s161 = scalar_lea.vmem %s3, %s160
      %s162 = smul.u32 32, %s14
      %p163 = scmp.lt.s32.totalorder %s162, 63
      %s164 = scalar_select %p163, %s162, 63
      %s165 = smul.addr %s164, 4
      %s166 = scalar_lea.vmem %s0, %s165
      %s167 = smul.u32 32, %s14
      %s168 = smul.u32 32, %s14
      %p169 = scmp.lt.s32.totalorder %s168, 63
      %s170 = scalar_select %p169, %s168, 63
      %s171 = smul.addr %s170, 4
      %s172 = scalar_lea.vmem %s3, %s171
      %s173 = smul.u32 32, %s14
      %v175 = vld [vmem:[%s166] sm:$0xf]
      %v176 = vld [vmem:[%s166 + $0x4] sm:$0xf]
      %v177 = vld [vmem:[%s166 + $0x8] sm:$0xf]
      %v178 = vld [vmem:[%s166 + $0xc] sm:$0xf]
      %v179 = vld [vmem:[%s166 + $0x10] sm:$0xf]
      %v180 = vld [vmem:[%s166 + $0x14] sm:$0xf]
      %v181 = vld [vmem:[%s166 + $0x18] sm:$0xf]
      %v182 = vld [vmem:[%s166 + $0x1c] sm:$0xf]
      %v183 = vld [vmem:[%s166 + $0x20] sm:$0xf]
      %v184 = vld [vmem:[%s166 + $0x24] sm:$0xf]
      %v185 = vld [vmem:[%s166 + $0x28] sm:$0xf]
      %v186 = vld [vmem:[%s166 + $0x2c] sm:$0xf]
      %v187 = vld [vmem:[%s166 + $0x30] sm:$0xf]
      %v188 = vld [vmem:[%s166 + $0x34] sm:$0xf]
      %v189 = vld [vmem:[%s166 + $0x38] sm:$0xf]
      %v190 = vld [vmem:[%s166 + $0x3c] sm:$0xf]
      %v191 = vld [vmem:[%s166 + $0x40] sm:$0xf]
      %v192 = vld [vmem:[%s166 + $0x44] sm:$0xf]
      %v193 = vld [vmem:[%s166 + $0x48] sm:$0xf]
      %v194 = vld [vmem:[%s166 + $0x4c] sm:$0xf]
      %v195 = vld [vmem:[%s166 + $0x50] sm:$0xf]
      %v196 = vld [vmem:[%s166 + $0x54] sm:$0xf]
      %v197 = vld [vmem:[%s166 + $0x58] sm:$0xf]
      %v198 = vld [vmem:[%s166 + $0x5c] sm:$0xf]
      %v199 = vld [vmem:[%s166 + $0x60] sm:$0xf]
      %v200 = vld [vmem:[%s166 + $0x64] sm:$0xf]
      %v201 = vld [vmem:[%s166 + $0x68] sm:$0xf]
      %v202 = vld [vmem:[%s166 + $0x6c] sm:$0xf]
      %v203 = vld [vmem:[%s166 + $0x70] sm:$0xf]
      %v204 = vld [vmem:[%s166 + $0x74] sm:$0xf]
      %v205 = vld [vmem:[%s166 + $0x78] sm:$0xf]
      %v206 = vld [vmem:[%s166 + $0x7c] sm:$0xf]
      %v207 = vld [vmem:[%s1] sm:$0xf]
      %v208 = vld [vmem:[%s1 + $0x4] sm:$0xf]
      %v209 = vld [vmem:[%s1 + $0x8] sm:$0xf]
      %v210 = vld [vmem:[%s1 + $0xc] sm:$0xf]
      %v211 = vld [vmem:[%s1 + $0x10] sm:$0xf]
      %v212 = vld [vmem:[%s1 + $0x14] sm:$0xf]
      %v213 = vld [vmem:[%s1 + $0x18] sm:$0xf]
      %v214 = vld [vmem:[%s1 + $0x1c] sm:$0xf]
      %v215 = vld [vmem:[%s1 + $0x20] sm:$0xf]
      %v216 = vld [vmem:[%s1 + $0x24] sm:$0xf]
      %v217 = vld [vmem:[%s2] sm:$0x1]
      %v219 = vlaneseq
      %v220 = vshrl.u32 %v219, 7
      %v221 = vsub.s32 0, %v220
      %v222 = vrot.slane %v217, %v221
      %v256 = vunpack.c.l.b16 %v175
      %v257 = vunpack.c.l.b16 %v176
      %v258 = vunpack.c.l.b16 %v177
      %v259 = vunpack.c.l.b16 %v178
      %v260 = vunpack.c.l.b16 %v179
      %v261 = vunpack.c.l.b16 %v180
      %v262 = vunpack.c.l.b16 %v181
      %v263 = vunpack.c.l.b16 %v182
      %v264 = vunpack.c.l.b16 %v183
      %v265 = vunpack.c.l.b16 %v184
      %v266 = vunpack.c.l.b16 %v185
      %v267 = vunpack.c.l.b16 %v186
      %v268 = vunpack.c.l.b16 %v187
      %v269 = vunpack.c.l.b16 %v188
      %v270 = vunpack.c.l.b16 %v189
      %v271 = vunpack.c.l.b16 %v190
      %v272 = vunpack.c.l.b16 %v191
      %v273 = vunpack.c.l.b16 %v192
      %v274 = vunpack.c.l.b16 %v193
      %v275 = vunpack.c.l.b16 %v194
      %v276 = vunpack.c.l.b16 %v195
      %v277 = vunpack.c.l.b16 %v196
      %v278 = vunpack.c.l.b16 %v197
      %v279 = vunpack.c.l.b16 %v198
      %v280 = vunpack.c.l.b16 %v199
      %v281 = vunpack.c.l.b16 %v200
      %v282 = vunpack.c.l.b16 %v201
      %v283 = vunpack.c.l.b16 %v202
      %v284 = vunpack.c.l.b16 %v203
      %v285 = vunpack.c.l.b16 %v204
      %v286 = vunpack.c.l.b16 %v205
      %v287 = vunpack.c.l.b16 %v206
      %v288 = vpack.c.b16 %v257, %v256
      %v289 = vpack.c.b16 %v259, %v258
      %v290 = vpack.c.b16 %v261, %v260
      %v291 = vpack.c.b16 %v263, %v262
      %v292 = vpack.c.b16 %v265, %v264
      %v293 = vpack.c.b16 %v267, %v266
      %v294 = vpack.c.b16 %v269, %v268
      %v295 = vpack.c.b16 %v271, %v270
      %v296 = vpack.c.b16 %v273, %v272
      %v297 = vpack.c.b16 %v275, %v274
      %v298 = vpack.c.b16 %v277, %v276
      %v299 = vpack.c.b16 %v279, %v278
      %v300 = vpack.c.b16 %v281, %v280
      %v301 = vpack.c.b16 %v283, %v282
      %v302 = vpack.c.b16 %v285, %v284
      %v303 = vpack.c.b16 %v287, %v286
      %v314 = vunpack.c.l.b16 %v207
      %v315 = vunpack.c.l.b16 %v208
      %v316 = vunpack.c.l.b16 %v209
      %v317 = vunpack.c.l.b16 %v210
      %v318 = vunpack.c.l.b16 %v211
      %v319 = vunpack.c.l.b16 %v212
      %v320 = vunpack.c.l.b16 %v213
      %v321 = vunpack.c.l.b16 %v214
      %v322 = vunpack.c.l.b16 %v215
      %v323 = vunpack.c.l.b16 %v216
      %v324 = vpack.c.b16 %v315, %v314
      %v325 = vpack.c.b16 %v317, %v316
      %v326 = vpack.c.b16 %v319, %v318
      %v327 = vpack.c.b16 %v321, %v320
      %v328 = vpack.c.b16 %v323, %v322
      %vm334 = vcmask 654336
      %v336 = vsel %vm334, %v288, 0
      %v339 = vsel %vm334, %v289, 0
      %v342 = vsel %vm334, %v290, 0
      %v345 = vsel %vm334, %v291, 0
      %v348 = vsel %vm334, %v292, 0
      %v351 = vsel %vm334, %v293, 0
      %v354 = vsel %vm334, %v294, 0
      %v357 = vsel %vm334, %v295, 0
      %v360 = vsel %vm334, %v296, 0
      %v363 = vsel %vm334, %v297, 0
      %v366 = vsel %vm334, %v298, 0
      %v369 = vsel %vm334, %v299, 0
      %v372 = vsel %vm334, %v300, 0
      %v375 = vsel %vm334, %v301, 0
      %v378 = vsel %vm334, %v302, 0
      %v381 = vsel %vm334, %v303, 0
      %383 = vmatprep.subr.bf16.mxu0 0
      %384 = vmatpush1.bf16.msra.mxu0 0
      %385 = vmatprep.subr.bf16.mxu0 0
      %386 = vmatpush1.bf16.msra.mxu0 0
      %387 = vmatprep.subr.bf16.mxu0 0
      %388 = vmatpush1.bf16.msra.mxu0 0
      %389 = vmatprep.subr.bf16.mxu0 0
      %390 = vmatpush1.bf16.msra.mxu0 %v328
      %391 = vmatprep.subr.bf16.mxu0 0
      %392 = vmatpush1.bf16.msra.mxu0 %v327
      %393 = vmatprep.subr.bf16.mxu0 0
      %394 = vmatpush1.bf16.msra.mxu0 %v326
      %395 = vmatprep.subr.bf16.mxu0 0
      %396 = vmatpush1.bf16.msra.mxu0 %v325
      %397 = vmatprep.subr.bf16.mxu0 0
      %398 = vmatpush1.bf16.msra.mxu0 %v324
      %399 = vmatprep.subr.bf16.mxu0 0
      %400 = vmatpush2.bf16.msra.mxu0 0
      %401 = vmatprep.subr.bf16.mxu0 0
      %402 = vmatpush2.bf16.msra.mxu0 0
      %403 = vmatprep.subr.bf16.mxu0 0
      %404 = vmatpush2.bf16.msra.mxu0 0
      %405 = vmatprep.subr.bf16.mxu0 0
      %406 = vmatpush2.bf16.msra.mxu0 0
      %407 = vmatprep.subr.bf16.mxu0 0
      %408 = vmatpush2.bf16.msra.mxu0 0
      %409 = vmatprep.subr.bf16.mxu0 0
      %410 = vmatpush2.bf16.msra.mxu0 0
      %411 = vmatprep.subr.bf16.mxu0 0
      %412 = vmatpush2.bf16.msra.mxu0 0
      %413 = vmatprep.subr.bf16.mxu0 0
      %414 = vmatpush2.bf16.msra.mxu0 0
      %415 = vmatprep.mubr.bf16.mxu0 0
      %416 = vmatmul.mubr.bf16.gmra.mxu0 %v336
      %v417 = vpop.f32.mrf.mxu0
      %v418 = vadd.f32 %v222, %v417
      %v419 = vpop.f32.mrf.mxu0
      %v420 = vpop.f32.mrf.mxu0
      %v421 = vadd.f32 %v222, %v420
      %v422 = vpop.f32.mrf.mxu0
      %423 = vmatprep.mubr.bf16.mxu0 0
      %424 = vmatmul.mubr.bf16.gmra.mxu0 %v339
      %v425 = vpop.f32.mrf.mxu0
      %v426 = vadd.f32 %v222, %v425
      %v427 = vpop.f32.mrf.mxu0
      %v428 = vpop.f32.mrf.mxu0
      %v429 = vadd.f32 %v222, %v428
      %v430 = vpop.f32.mrf.mxu0
      %431 = vmatprep.mubr.bf16.mxu0 0
      %432 = vmatmul.mubr.bf16.gmra.mxu0 %v342
      %v433 = vpop.f32.mrf.mxu0
      %v434 = vadd.f32 %v222, %v433
      %v435 = vpop.f32.mrf.mxu0
      %v436 = vpop.f32.mrf.mxu0
      %v437 = vadd.f32 %v222, %v436
      %v438 = vpop.f32.mrf.mxu0
      %439 = vmatprep.mubr.bf16.mxu0 0
      %440 = vmatmul.mubr.bf16.gmra.mxu0 %v345
      %v441 = vpop.f32.mrf.mxu0
      %v442 = vadd.f32 %v222, %v441
      %v443 = vpop.f32.mrf.mxu0
      %v444 = vpop.f32.mrf.mxu0
      %v445 = vadd.f32 %v222, %v444
      %v446 = vpop.f32.mrf.mxu0
      %447 = vmatprep.mubr.bf16.mxu0 0
      %448 = vmatmul.mubr.bf16.gmra.mxu0 %v348
      %v449 = vpop.f32.mrf.mxu0
      %v450 = vadd.f32 %v222, %v449
      %v451 = vpop.f32.mrf.mxu0
      %v452 = vpop.f32.mrf.mxu0
      %v453 = vadd.f32 %v222, %v452
      %v454 = vpop.f32.mrf.mxu0
      %455 = vmatprep.mubr.bf16.mxu0 0
      %456 = vmatmul.mubr.bf16.gmra.mxu0 %v351
      %v457 = vpop.f32.mrf.mxu0
      %v458 = vadd.f32 %v222, %v457
      %v459 = vpop.f32.mrf.mxu0
      %v460 = vpop.f32.mrf.mxu0
      %v461 = vadd.f32 %v222, %v460
      %v462 = vpop.f32.mrf.mxu0
      %463 = vmatprep.mubr.bf16.mxu0 0
      %464 = vmatmul.mubr.bf16.gmra.mxu0 %v354
      %v465 = vpop.f32.mrf.mxu0
      %v466 = vadd.f32 %v222, %v465
      %v467 = vpop.f32.mrf.mxu0
      %v468 = vpop.f32.mrf.mxu0
      %v469 = vadd.f32 %v222, %v468
      %v470 = vpop.f32.mrf.mxu0
      %471 = vmatprep.mubr.bf16.mxu0 0
      %472 = vmatmul.mubr.bf16.gmra.mxu0 %v357
      %v473 = vpop.f32.mrf.mxu0
      %v474 = vadd.f32 %v222, %v473
      %v475 = vpop.f32.mrf.mxu0
      %v476 = vpop.f32.mrf.mxu0
      %v477 = vadd.f32 %v222, %v476
      %v478 = vpop.f32.mrf.mxu0
      %479 = vmatprep.mubr.bf16.mxu0 0
      %480 = vmatmul.mubr.bf16.gmra.mxu0 %v360
      %v481 = vpop.f32.mrf.mxu0
      %v482 = vadd.f32 %v222, %v481
      %v483 = vpop.f32.mrf.mxu0
      %v484 = vpop.f32.mrf.mxu0
      %v485 = vadd.f32 %v222, %v484
      %v486 = vpop.f32.mrf.mxu0
      %487 = vmatprep.mubr.bf16.mxu0 0
      %488 = vmatmul.mubr.bf16.gmra.mxu0 %v363
      %v489 = vpop.f32.mrf.mxu0
      %v490 = vadd.f32 %v222, %v489
      %v491 = vpop.f32.mrf.mxu0
      %v492 = vpop.f32.mrf.mxu0
      %v493 = vadd.f32 %v222, %v492
      %v494 = vpop.f32.mrf.mxu0
      %495 = vmatprep.mubr.bf16.mxu0 0
      %496 = vmatmul.mubr.bf16.gmra.mxu0 %v366
      %v497 = vpop.f32.mrf.mxu0
      %v498 = vadd.f32 %v222, %v497
      %v499 = vpop.f32.mrf.mxu0
      %v500 = vpop.f32.mrf.mxu0
      %v501 = vadd.f32 %v222, %v500
      %v502 = vpop.f32.mrf.mxu0
      %503 = vmatprep.mubr.bf16.mxu0 0
      %504 = vmatmul.mubr.bf16.gmra.mxu0 %v369
      %v505 = vpop.f32.mrf.mxu0
      %v506 = vadd.f32 %v222, %v505
      %v507 = vpop.f32.mrf.mxu0
      %v508 = vpop.f32.mrf.mxu0
      %v509 = vadd.f32 %v222, %v508
      %v510 = vpop.f32.mrf.mxu0
      %511 = vmatprep.mubr.bf16.mxu0 0
      %512 = vmatmul.mubr.bf16.gmra.mxu0 %v372
      %v513 = vpop.f32.mrf.mxu0
      %v514 = vadd.f32 %v222, %v513
      %v515 = vpop.f32.mrf.mxu0
      %v516 = vpop.f32.mrf.mxu0
      %v517 = vadd.f32 %v222, %v516
      %v518 = vpop.f32.mrf.mxu0
      %519 = vmatprep.mubr.bf16.mxu0 0
      %520 = vmatmul.mubr.bf16.gmra.mxu0 %v375
      %v521 = vpop.f32.mrf.mxu0
      %v522 = vadd.f32 %v222, %v521
      %v523 = vpop.f32.mrf.mxu0
      %v524 = vpop.f32.mrf.mxu0
      %v525 = vadd.f32 %v222, %v524
      %v526 = vpop.f32.mrf.mxu0
      %527 = vmatprep.mubr.bf16.mxu0 0
      %528 = vmatmul.mubr.bf16.gmra.mxu0 %v378
      %v529 = vpop.f32.mrf.mxu0
      %v530 = vadd.f32 %v222, %v529
      %v531 = vpop.f32.mrf.mxu0
      %v532 = vpop.f32.mrf.mxu0
      %v533 = vadd.f32 %v222, %v532
      %v534 = vpop.f32.mrf.mxu0
      %535 = vmatprep.mubr.bf16.mxu0 0
      %536 = vmatmul.mubr.bf16.gmra.mxu0 %v381
      %v537 = vpop.f32.mrf.mxu0
      %v538 = vadd.f32 %v222, %v537
      %v539 = vpop.f32.mrf.mxu0
      %v540 = vpop.f32.mrf.mxu0
      %v541 = vadd.f32 %v222, %v540
      %v542 = vpop.f32.mrf.mxu0
      %543 = vdwg.mxu0
      %v544 = vmax.f32 %v418, 0.0
      %v545 = vmax.f32 %v421, 0.0
      %v546 = vmax.f32 %v426, 0.0
      %v547 = vmax.f32 %v429, 0.0
      %v548 = vmax.f32 %v434, 0.0
      %v549 = vmax.f32 %v437, 0.0
      %v550 = vmax.f32 %v442, 0.0
      %v551 = vmax.f32 %v445, 0.0
      %v552 = vmax.f32 %v450, 0.0
      %v553 = vmax.f32 %v453, 0.0
      %v554 = vmax.f32 %v458, 0.0
      %v555 = vmax.f32 %v461, 0.0
      %v556 = vmax.f32 %v466, 0.0
      %v557 = vmax.f32 %v469, 0.0
      %v558 = vmax.f32 %v474, 0.0
      %v559 = vmax.f32 %v477, 0.0
      %v560 = vmax.f32 %v482, 0.0
      %v561 = vmax.f32 %v485, 0.0
      %v562 = vmax.f32 %v490, 0.0
      %v563 = vmax.f32 %v493, 0.0
      %v564 = vmax.f32 %v498, 0.0
      %v565 = vmax.f32 %v501, 0.0
      %v566 = vmax.f32 %v506, 0.0
      %v567 = vmax.f32 %v509, 0.0
      %v568 = vmax.f32 %v514, 0.0
      %v569 = vmax.f32 %v517, 0.0
      %v570 = vmax.f32 %v522, 0.0
      %v571 = vmax.f32 %v525, 0.0
      %v572 = vmax.f32 %v530, 0.0
      %v573 = vmax.f32 %v533, 0.0
      %v574 = vmax.f32 %v538, 0.0
      %v575 = vmax.f32 %v541, 0.0
      %v576 = vpack.c.bf16 %v545, %v544
      %v577 = vpack.c.bf16 %v547, %v546
      %v578 = vpack.c.bf16 %v549, %v548
      %v579 = vpack.c.bf16 %v551, %v550
      %v580 = vpack.c.bf16 %v553, %v552
      %v581 = vpack.c.bf16 %v555, %v554
      %v582 = vpack.c.bf16 %v557, %v556
      %v583 = vpack.c.bf16 %v559, %v558
      %v584 = vpack.c.bf16 %v561, %v560
      %v585 = vpack.c.bf16 %v563, %v562
      %v586 = vpack.c.bf16 %v565, %v564
      %v587 = vpack.c.bf16 %v567, %v566
      %v588 = vpack.c.bf16 %v569, %v568
      %v589 = vpack.c.bf16 %v571, %v570
      %v590 = vpack.c.bf16 %v573, %v572
      %v591 = vpack.c.bf16 %v575, %v574
      %v608 = vunpack.c.l.b16 %v576
      %v609 = vunpack.c.h.b16 %v576
      %v610 = vunpack.c.l.b16 %v577
      %v611 = vunpack.c.h.b16 %v577
      %v612 = vunpack.c.l.b16 %v578
      %v613 = vunpack.c.h.b16 %v578
      %v614 = vunpack.c.l.b16 %v579
      %v615 = vunpack.c.h.b16 %v579
      %v616 = vunpack.c.l.b16 %v580
      %v617 = vunpack.c.h.b16 %v580
      %v618 = vunpack.c.l.b16 %v581
      %v619 = vunpack.c.h.b16 %v581
      %v620 = vunpack.c.l.b16 %v582
      %v621 = vunpack.c.h.b16 %v582
      %v622 = vunpack.c.l.b16 %v583
      %v623 = vunpack.c.h.b16 %v583
      %v624 = vunpack.c.l.b16 %v584
      %v625 = vunpack.c.h.b16 %v584
      %v626 = vunpack.c.l.b16 %v585
      %v627 = vunpack.c.h.b16 %v585
      %v628 = vunpack.c.l.b16 %v586
      %v629 = vunpack.c.h.b16 %v586
      %v630 = vunpack.c.l.b16 %v587
      %v631 = vunpack.c.h.b16 %v587
      %v632 = vunpack.c.l.b16 %v588
      %v633 = vunpack.c.h.b16 %v588
      %v634 = vunpack.c.l.b16 %v589
      %v635 = vunpack.c.h.b16 %v589
      %v636 = vunpack.c.l.b16 %v590
      %v637 = vunpack.c.h.b16 %v590
      %v638 = vunpack.c.l.b16 %v591
      %v639 = vunpack.c.h.b16 %v591
      %v640 = vpack.c.b16 %v608, %v608
      %v641 = vpack.c.b16 %v609, %v609
      %v642 = vpack.c.b16 %v610, %v610
      %v643 = vpack.c.b16 %v611, %v611
      %v644 = vpack.c.b16 %v612, %v612
      %v645 = vpack.c.b16 %v613, %v613
      %v646 = vpack.c.b16 %v614, %v614
      %v647 = vpack.c.b16 %v615, %v615
      %v648 = vpack.c.b16 %v616, %v616
      %v649 = vpack.c.b16 %v617, %v617
      %v650 = vpack.c.b16 %v618, %v618
      %v651 = vpack.c.b16 %v619, %v619
      %v652 = vpack.c.b16 %v620, %v620
      %v653 = vpack.c.b16 %v621, %v621
      %v654 = vpack.c.b16 %v622, %v622
      %v655 = vpack.c.b16 %v623, %v623
      %v656 = vpack.c.b16 %v624, %v624
      %v657 = vpack.c.b16 %v625, %v625
      %v658 = vpack.c.b16 %v626, %v626
      %v659 = vpack.c.b16 %v627, %v627
      %v660 = vpack.c.b16 %v628, %v628
      %v661 = vpack.c.b16 %v629, %v629
      %v662 = vpack.c.b16 %v630, %v630
      %v663 = vpack.c.b16 %v631, %v631
      %v664 = vpack.c.b16 %v632, %v632
      %v665 = vpack.c.b16 %v633, %v633
      %v666 = vpack.c.b16 %v634, %v634
      %v667 = vpack.c.b16 %v635, %v635
      %v668 = vpack.c.b16 %v636, %v636
      %v669 = vpack.c.b16 %v637, %v637
      %v670 = vpack.c.b16 %v638, %v638
      %v671 = vpack.c.b16 %v639, %v639
      %704 = vst [vmem:[%s172] sm:$0xf] %v640
      %705 = vst [vmem:[%s172 + $0x4] sm:$0xf] %v641
      %706 = vst [vmem:[%s172 + $0x8] sm:$0xf] %v642
      %707 = vst [vmem:[%s172 + $0xc] sm:$0xf] %v643
      %708 = vst [vmem:[%s172 + $0x10] sm:$0xf] %v644
      %709 = vst [vmem:[%s172 + $0x14] sm:$0xf] %v645
      %710 = vst [vmem:[%s172 + $0x18] sm:$0xf] %v646
      %711 = vst [vmem:[%s172 + $0x1c] sm:$0xf] %v647
      %712 = vst [vmem:[%s172 + $0x20] sm:$0xf] %v648
      %713 = vst [vmem:[%s172 + $0x24] sm:$0xf] %v649
      %714 = vst [vmem:[%s172 + $0x28] sm:$0xf] %v650
      %715 = vst [vmem:[%s172 + $0x2c] sm:$0xf] %v651
      %716 = vst [vmem:[%s172 + $0x30] sm:$0xf] %v652
      %717 = vst [vmem:[%s172 + $0x34] sm:$0xf] %v653
      %718 = vst [vmem:[%s172 + $0x38] sm:$0xf] %v654
      %719 = vst [vmem:[%s172 + $0x3c] sm:$0xf] %v655
      %720 = vst [vmem:[%s172 + $0x40] sm:$0xf] %v656
      %721 = vst [vmem:[%s172 + $0x44] sm:$0xf] %v657
      %722 = vst [vmem:[%s172 + $0x48] sm:$0xf] %v658
      %723 = vst [vmem:[%s172 + $0x4c] sm:$0xf] %v659
      %724 = vst [vmem:[%s172 + $0x50] sm:$0xf] %v660
      %725 = vst [vmem:[%s172 + $0x54] sm:$0xf] %v661
      %726 = vst [vmem:[%s172 + $0x58] sm:$0xf] %v662
      %727 = vst [vmem:[%s172 + $0x5c] sm:$0xf] %v663
      %728 = vst [vmem:[%s172 + $0x60] sm:$0xf] %v664
      %729 = vst [vmem:[%s172 + $0x64] sm:$0xf] %v665
      %730 = vst [vmem:[%s172 + $0x68] sm:$0xf] %v666
      %731 = vst [vmem:[%s172 + $0x6c] sm:$0xf] %v667
      %732 = vst [vmem:[%s172 + $0x70] sm:$0xf] %v668
      %733 = vst [vmem:[%s172 + $0x74] sm:$0xf] %v669
      %734 = vst [vmem:[%s172 + $0x78] sm:$0xf] %v670
      %735 = vst [vmem:[%s172 + $0x7c] sm:$0xf] %v671
      %s736 = smul.u32 32, %s14
      %p737 = scmp.lt.s32.totalorder %s736, 63
      %s738 = scalar_select %p737, %s736, 63
      %s739 = smul.addr %s738, 4
      %s740 = scalar_lea.vmem %s3, %s739
      // Predicated region
      $region33: #{_forward.4} parent=31 // pred_check
        %p741 = pneg %p100
      $region34: #{_forward.4} parent=31 // pred_check_branch
        %743 = sbr.rel (%p741) target = $region36
      $region35: #{_forward.4} parent=31 // pred_region
        %s744 = smul.u32 32, %s14
      $region36: #{_forward.4} parent=31 // pred_fallthru
        _
    $region32: #{_forward.4} parent=5 // pred_fallthru
      _
    %p745 = scmp.le.s32.totalorder 2, %s9
    // Predicated region
    $region37: #{_forward.4} parent=5 // pred_check
      %p746 = pneg %p745
    $region38: #{_forward.4} parent=5 // pred_check_branch
      %748 = sbr.rel (%p746) target = $region40
    $region39: #{_forward.4} parent=5 // pred_region
      %s749 = ssub.s32 %s9, 2
      // Predicated region
      $region41: #{_forward.4} parent=39 // pred_check
        %p750 = pneg %p106
      $region42: #{_forward.4} parent=39 // pred_check_branch
        %752 = sbr.rel (%p750) target = $region44
      $region43: #{_forward.4} parent=39 // pred_region
        %s753 = smul.u32 32, %s15
        %p754 = scmp.lt.s32.totalorder %s753, 63
        %s755 = scalar_select %p754, %s753, 63
        %s756 = smul.addr %s755, 4
        %s757 = scalar_lea.vmem %s3, %s756
      $region44: #{_forward.4} parent=39 // pred_fallthru
        _
    $region40: #{_forward.4} parent=5 // pred_fallthru
      _
  $region6: #{_forward.4} parent=0 // loop_footer
    %s13 = sadd.s32 1, %s9
  $region7: #{_forward.4} parent=0 // loop_footer_branch
    %8 = sbr.rel target = $region3
  $region8: #{_forward.4} parent=0 // loop_exit
    _

// kernel: reverse
$region0: #{reverse}
  #allocation0 [shape = 's32[1]{0}', space=sflag, size = 0x4, scoped, tag = 'scoped memory for reverse']
  %s0 = inlined_call_operand.vmem [shape: bf16[3,3,48,64], index: 0, kind: input, shape index: {}]
  %s1 = inlined_call_operand.vmem [shape: bf16[3,3,48,64], index: 1, kind: output, shape index: {}]
  %s2 = scalar_lea.vmem %s0, 192
  %v3 = vld [vmem:[%s2] sm:$0xf]
  %v4 = vunpack.c.l.bf16 %v3
  %v5 = vunpack.c.h.bf16 %v3
  %v6 = vpack.c.bf16 0.0, %v4
  %7 = vst [vmem:[%s1] sm:$0xf] %v6
  %s8 = scalar_lea.vmem %s0, 120
  %v9 = vld [vmem:[%s8] sm:$0xf]
  %v10 = vunpack.c.l.bf16 %v9
  %v11 = vunpack.c.h.bf16 %v9
  %s12 = scalar_lea.vmem %s1, 72
  %v13 = vpack.c.bf16 0.0, %v10
  %14 = vst [vmem:[%s12] sm:$0xf] %v13
  %s15 = scalar_lea.vmem %s0, 48
  %v16 = vld [vmem:[%s15] sm:$0xf]
  %v17 = vunpack.c.l.bf16 %v16
  %v18 = vunpack.c.h.bf16 %v16
  %s19 = scalar_lea.vmem %s1, 144
  %v20 = vpack.c.bf16 0.0, %v17
  %21 = vst [vmem:[%s19] sm:$0xf] %v20
  %s22 = scalar_lea.vmem %s0, 168
  %v23 = vld [vmem:[%s22] sm:$0xf]
  %v24 = vunpack.c.l.bf16 %v23
  %v25 = vunpack.c.h.bf16 %v23
  %s26 = scalar_lea.vmem %s1, 24
  %v27 = vpack.c.bf16 0.0, %v24
  %28 = vst [vmem:[%s26] sm:$0xf] %v27
  %s29 = scalar_lea.vmem %s0, 96
  %v30 = vld [vmem:[%s29] sm:$0xf]
  %v31 = vunpack.c.l.bf16 %v30
  %v32 = vunpack.c.h.bf16 %v30
  %s33 = scalar_lea.vmem %s1, 96
  %v34 = vpack.c.bf16 0.0, %v31
  %35 = vst [vmem:[%s33] sm:$0xf] %v34
  %s36 = scalar_lea.vmem %s0, 24
  %v37 = vld [vmem:[%s36] sm:$0xf]
  %v38 = vunpack.c.l.bf16 %v37
  %v39 = vunpack.c.h.bf16 %v37
  %s40 = scalar_lea.vmem %s1, 168
  %v41 = vpack.c.bf16 0.0, %v38
  %42 = vst [vmem:[%s40] sm:$0xf] %v41
  %s43 = scalar_lea.vmem %s0, 144
  %v44 = vld [vmem:[%s43] sm:$0xf]
  %v45 = vunpack.c.l.bf16 %v44
  %v46 = vunpack.c.h.bf16 %v44
  %s47 = scalar_lea.vmem %s1, 48
  %v48 = vpack.c.bf16 0.0, %v45
  %49 = vst [vmem:[%s47] sm:$0xf] %v48
  %s50 = scalar_lea.vmem %s0, 72
  %v51 = vld [vmem:[%s50] sm:$0xf]
  %v52 = vunpack.c.l.bf16 %v51
  %v53 = vunpack.c.h.bf16 %v51
  %s54 = scalar_lea.vmem %s1, 120
  %v55 = vpack.c.bf16 0.0, %v52
  %56 = vst [vmem:[%s54] sm:$0xf] %v55
  %v57 = vld [vmem:[%s0] sm:$0xf]
  %v58 = vunpack.c.l.bf16 %v57
  %v59 = vunpack.c.h.bf16 %v57
  %s60 = scalar_lea.vmem %s1, 192
  %v61 = vpack.c.bf16 0.0, %v58
  %62 = vst [vmem:[%s60] sm:$0xf] %v61
  %s63 = scalar_lea.vmem %s0, 196
  %v64 = vld [vmem:[%s63] sm:$0xf]
  %v65 = vunpack.c.l.bf16 %v64
  %v66 = vunpack.c.h.bf16 %v64
  %s67 = scalar_lea.vmem %s1, 4
  %v68 = vpack.c.bf16 0.0, %v65
  %69 = vst [vmem:[%s67] sm:$0xf] %v68
  %s70 = scalar_lea.vmem %s0, 124
  %v71 = vld [vmem:[%s70] sm:$0xf]
  %v72 = vunpack.c.l.bf16 %v71
  %v73 = vunpack.c.h.bf16 %v71
  %s74 = scalar_lea.vmem %s1, 76
  %v75 = vpack.c.bf16 0.0, %v72
  %76 = vst [vmem:[%s74] sm:$0xf] %v75
  %s77 = scalar_lea.vmem %s0, 52
  %v78 = vld [vmem:[%s77] sm:$0xf]
  %v79 = vunpack.c.l.bf16 %v78
  %v80 = vunpack.c.h.bf16 %v78
  %s81 = scalar_lea.vmem %s1, 148
  %v82 = vpack.c.bf16 0.0, %v79
  %83 = vst [vmem:[%s81] sm:$0xf] %v82
  %s84 = scalar_lea.vmem %s0, 172
  %v85 = vld [vmem:[%s84] sm:$0xf]
  %v86 = vunpack.c.l.bf16 %v85
  %v87 = vunpack.c.h.bf16 %v85
  %s88 = scalar_lea.vmem %s1, 28
  %v89 = vpack.c.bf16 0.0, %v86
  %90 = vst [vmem:[%s88] sm:$0xf] %v89
  %s91 = scalar_lea.vmem %s0, 100
  %v92 = vld [vmem:[%s91] sm:$0xf]
  %v93 = vunpack.c.l.bf16 %v92
  %v94 = vunpack.c.h.bf16 %v92
  %s95 = scalar_lea.vmem %s1, 100
  %v96 = vpack.c.bf16 0.0, %v93
  %97 = vst [vmem:[%s95] sm:$0xf] %v96
  %s98 = scalar_lea.vmem %s0, 28
  %v99 = vld [vmem:[%s98] sm:$0xf]
  %v100 = vunpack.c.l.bf16 %v99
  %v101 = vunpack.c.h.bf16 %v99
  %s102 = scalar_lea.vmem %s1, 172
  %v103 = vpack.c.bf16 0.0, %v100
  %104 = vst [vmem:[%s102] sm:$0xf] %v103
  %s105 = scalar_lea.vmem %s0, 148
  %v106 = vld [vmem:[%s105] sm:$0xf]
  %v107 = vunpack.c.l.bf16 %v106
  %v108 = vunpack.c.h.bf16 %v106
  %s109 = scalar_lea.vmem %s1, 52
  %v110 = vpack.c.bf16 0.0, %v107
  %111 = vst [vmem:[%s109] sm:$0xf] %v110
  %s112 = scalar_lea.vmem %s0, 76
  %v113 = vld [vmem:[%s112] sm:$0xf]
  %v114 = vunpack.c.l.bf16 %v113
  %v115 = vunpack.c.h.bf16 %v113
  %s116 = scalar_lea.vmem %s1, 124
  %v117 = vpack.c.bf16 0.0, %v114
  %118 = vst [vmem:[%s116] sm:$0xf] %v117
  %s119 = scalar_lea.vmem %s0, 4
  %v120 = vld [vmem:[%s119] sm:$0xf]
  %v121 = vunpack.c.l.bf16 %v120
  %v122 = vunpack.c.h.bf16 %v120
  %s123 = scalar_lea.vmem %s1, 196
  %v124 = vpack.c.bf16 0.0, %v121
  %125 = vst [vmem:[%s123] sm:$0xf] %v124
  %s126 = scalar_lea.vmem %s0, 200
  %v127 = vld [vmem:[%s126] sm:$0xf]
  %v128 = vunpack.c.l.bf16 %v127
  %v129 = vunpack.c.h.bf16 %v127
  %s130 = scalar_lea.vmem %s1, 8
  %v131 = vpack.c.bf16 0.0, %v128
  %132 = vst [vmem:[%s130] sm:$0xf] %v131
  %s133 = scalar_lea.vmem %s0, 128
  %v134 = vld [vmem:[%s133] sm:$0xf]
  %v135 = vunpack.c.l.bf16 %v134
  %v136 = vunpack.c.h.bf16 %v134
  %s137 = scalar_lea.vmem %s1, 80
  %v138 = vpack.c.bf16 0.0, %v135
  %139 = vst [vmem:[%s137] sm:$0xf] %v138
  %s140 = scalar_lea.vmem %s0, 56
  %v141 = vld [vmem:[%s140] sm:$0xf]
  %v142 = vunpack.c.l.bf16 %v141
  %v143 = vunpack.c.h.bf16 %v141
  %s144 = scalar_lea.vmem %s1, 152
  %v145 = vpack.c.bf16 0.0, %v142
  %146 = vst [vmem:[%s144] sm:$0xf] %v145
  %s147 = scalar_lea.vmem %s0, 176
  %v148 = vld [vmem:[%s147] sm:$0xf]
  %v149 = vunpack.c.l.bf16 %v148
  %v150 = vunpack.c.h.bf16 %v148
  %s151 = scalar_lea.vmem %s1, 32
  %v152 = vpack.c.bf16 0.0, %v149
  %153 = vst [vmem:[%s151] sm:$0xf] %v152
  %s154 = scalar_lea.vmem %s0, 104
  %v155 = vld [vmem:[%s154] sm:$0xf]
  %v156 = vunpack.c.l.bf16 %v155
  %v157 = vunpack.c.h.bf16 %v155
  %s158 = scalar_lea.vmem %s1, 104
  %v159 = vpack.c.bf16 0.0, %v156
  %160 = vst [vmem:[%s158] sm:$0xf] %v159
  %s161 = scalar_lea.vmem %s0, 32
  %v162 = vld [vmem:[%s161] sm:$0xf]
  %v163 = vunpack.c.l.bf16 %v162
  %v164 = vunpack.c.h.bf16 %v162
  %s165 = scalar_lea.vmem %s1, 176
  %v166 = vpack.c.bf16 0.0, %v163
  %167 = vst [vmem:[%s165] sm:$0xf] %v166
  %s168 = scalar_lea.vmem %s0, 152
  %v169 = vld [vmem:[%s168] sm:$0xf]
  %v170 = vunpack.c.l.bf16 %v169
  %v171 = vunpack.c.h.bf16 %v169
  %s172 = scalar_lea.vmem %s1, 56
  %v173 = vpack.c.bf16 0.0, %v170
  %174 = vst [vmem:[%s172] sm:$0xf] %v173
  %s175 = scalar_lea.vmem %s0, 80
  %v176 = vld [vmem:[%s175] sm:$0xf]
  %v177 = vunpack.c.l.bf16 %v176
  %v178 = vunpack.c.h.bf16 %v176
  %s179 = scalar_lea.vmem %s1, 128
  %v180 = vpack.c.bf16 0.0, %v177
  %181 = vst [vmem:[%s179] sm:$0xf] %v180
  %s182 = scalar_lea.vmem %s0, 8
  %v183 = vld [vmem:[%s182] sm:$0xf]
  %v184 = vunpack.c.l.bf16 %v183
  %v185 = vunpack.c.h.bf16 %v183
  %s186 = scalar_lea.vmem %s1, 200
  %v187 = vpack.c.bf16 0.0, %v184
  %188 = vst [vmem:[%s186] sm:$0xf] %v187
  %s189 = scalar_lea.vmem %s0, 204
  %v190 = vld [vmem:[%s189] sm:$0xf]
  %v191 = vunpack.c.l.bf16 %v190
  %v192 = vunpack.c.h.bf16 %v190
  %s193 = scalar_lea.vmem %s1, 12
  %v194 = vpack.c.bf16 0.0, %v191
  %195 = vst [vmem:[%s193] sm:$0xf] %v194
  %s196 = scalar_lea.vmem %s0, 132
  %v197 = vld [vmem:[%s196] sm:$0xf]
  %v198 = vunpack.c.l.bf16 %v197
  %v199 = vunpack.c.h.bf16 %v197
  %s200 = scalar_lea.vmem %s1, 84
  %v201 = vpack.c.bf16 0.0, %v198
  %202 = vst [vmem:[%s200] sm:$0xf] %v201
  %s203 = scalar_lea.vmem %s0, 60
  %v204 = vld [vmem:[%s203] sm:$0xf]
  %v205 = vunpack.c.l.bf16 %v204
  %v206 = vunpack.c.h.bf16 %v204
  %s207 = scalar_lea.vmem %s1, 156
  %v208 = vpack.c.bf16 0.0, %v205
  %209 = vst [vmem:[%s207] sm:$0xf] %v208
  %s210 = scalar_lea.vmem %s0, 180
  %v211 = vld [vmem:[%s210] sm:$0xf]
  %v212 = vunpack.c.l.bf16 %v211
  %v213 = vunpack.c.h.bf16 %v211
  %s214 = scalar_lea.vmem %s1, 36
  %v215 = vpack.c.bf16 0.0, %v212
  %216 = vst [vmem:[%s214] sm:$0xf] %v215
  %s217 = scalar_lea.vmem %s0, 108
  %v218 = vld [vmem:[%s217] sm:$0xf]
  %v219 = vunpack.c.l.bf16 %v218
  %v220 = vunpack.c.h.bf16 %v218
  %s221 = scalar_lea.vmem %s1, 108
  %v222 = vpack.c.bf16 0.0, %v219
  %223 = vst [vmem:[%s221] sm:$0xf] %v222
  %s224 = scalar_lea.vmem %s0, 36
  %v225 = vld [vmem:[%s224] sm:$0xf]
  %v226 = vunpack.c.l.bf16 %v225
  %v227 = vunpack.c.h.bf16 %v225
  %s228 = scalar_lea.vmem %s1, 180
  %v229 = vpack.c.bf16 0.0, %v226
  %230 = vst [vmem:[%s228] sm:$0xf] %v229
  %s231 = scalar_lea.vmem %s0, 156
  %v232 = vld [vmem:[%s231] sm:$0xf]
  %v233 = vunpack.c.l.bf16 %v232
  %v234 = vunpack.c.h.bf16 %v232
  %s235 = scalar_lea.vmem %s1, 60
  %v236 = vpack.c.bf16 0.0, %v233
  %237 = vst [vmem:[%s235] sm:$0xf] %v236
  %s238 = scalar_lea.vmem %s0, 84
  %v239 = vld [vmem:[%s238] sm:$0xf]
  %v240 = vunpack.c.l.bf16 %v239
  %v241 = vunpack.c.h.bf16 %v239
  %s242 = scalar_lea.vmem %s1, 132
  %v243 = vpack.c.bf16 0.0, %v240
  %244 = vst [vmem:[%s242] sm:$0xf] %v243
  %s245 = scalar_lea.vmem %s0, 12
  %v246 = vld [vmem:[%s245] sm:$0xf]
  %v247 = vunpack.c.l.bf16 %v246
  %v248 = vunpack.c.h.bf16 %v246
  %s249 = scalar_lea.vmem %s1, 204
  %v250 = vpack.c.bf16 0.0, %v247
  %251 = vst [vmem:[%s249] sm:$0xf] %v250
  %s252 = scalar_lea.vmem %s0, 208
  %v253 = vld [vmem:[%s252] sm:$0xf]
  %v254 = vunpack.c.l.bf16 %v253
  %v255 = vunpack.c.h.bf16 %v253
  %s256 = scalar_lea.vmem %s1, 16
  %v257 = vpack.c.bf16 0.0, %v254
  %258 = vst [vmem:[%s256] sm:$0xf] %v257
  %s259 = scalar_lea.vmem %s0, 136
  %v260 = vld [vmem:[%s259] sm:$0xf]
  %v261 = vunpack.c.l.bf16 %v260
  %v262 = vunpack.c.h.bf16 %v260
  %s263 = scalar_lea.vmem %s1, 88
  %v264 = vpack.c.bf16 0.0, %v261
  %265 = vst [vmem:[%s263] sm:$0xf] %v264
  %s266 = scalar_lea.vmem %s0, 64
  %v267 = vld [vmem:[%s266] sm:$0xf]
  %v268 = vunpack.c.l.bf16 %v267
  %v269 = vunpack.c.h.bf16 %v267
  %s270 = scalar_lea.vmem %s1, 160
  %v271 = vpack.c.bf16 0.0, %v268
  %272 = vst [vmem:[%s270] sm:$0xf] %v271
  %s273 = scalar_lea.vmem %s0, 184
  %v274 = vld [vmem:[%s273] sm:$0xf]
  %v275 = vunpack.c.l.bf16 %v274
  %v276 = vunpack.c.h.bf16 %v274
  %s277 = scalar_lea.vmem %s1, 40
  %v278 = vpack.c.bf16 0.0, %v275
  %279 = vst [vmem:[%s277] sm:$0xf] %v278
  %s280 = scalar_lea.vmem %s0, 112
  %v281 = vld [vmem:[%s280] sm:$0xf]
  %v282 = vunpack.c.l.bf16 %v281
  %v283 = vunpack.c.h.bf16 %v281
  %s284 = scalar_lea.vmem %s1, 112
  %v285 = vpack.c.bf16 0.0, %v282
  %286 = vst [vmem:[%s284] sm:$0xf] %v285
  %s287 = scalar_lea.vmem %s0, 40
  %v288 = vld [vmem:[%s287] sm:$0xf]
  %v289 = vunpack.c.l.bf16 %v288
  %v290 = vunpack.c.h.bf16 %v288
  %s291 = scalar_lea.vmem %s1, 184
  %v292 = vpack.c.bf16 0.0, %v289
  %293 = vst [vmem:[%s291] sm:$0xf] %v292
  %s294 = scalar_lea.vmem %s0, 160
  %v295 = vld [vmem:[%s294] sm:$0xf]
  %v296 = vunpack.c.l.bf16 %v295
  %v297 = vunpack.c.h.bf16 %v295
  %s298 = scalar_lea.vmem %s1, 64
  %v299 = vpack.c.bf16 0.0, %v296
  %300 = vst [vmem:[%s298] sm:$0xf] %v299
  %s301 = scalar_lea.vmem %s0, 88
  %v302 = vld [vmem:[%s301] sm:$0xf]
  %v303 = vunpack.c.l.bf16 %v302
  %v304 = vunpack.c.h.bf16 %v302
  %s305 = scalar_lea.vmem %s1, 136
  %v306 = vpack.c.bf16 0.0, %v303
  %307 = vst [vmem:[%s305] sm:$0xf] %v306
  %s308 = scalar_lea.vmem %s0, 16
  %v309 = vld [vmem:[%s308] sm:$0xf]
  %v310 = vunpack.c.l.bf16 %v309
  %v311 = vunpack.c.h.bf16 %v309
  %s312 = scalar_lea.vmem %s1, 208
  %v313 = vpack.c.bf16 0.0, %v310
  %314 = vst [vmem:[%s312] sm:$0xf] %v313
  %s315 = scalar_lea.vmem %s0, 212
  %v316 = vld [vmem:[%s315] sm:$0xf]
  %v317 = vunpack.c.l.bf16 %v316
  %v318 = vunpack.c.h.bf16 %v316
  %s319 = scalar_lea.vmem %s1, 20
  %v320 = vpack.c.bf16 0.0, %v317
  %321 = vst [vmem:[%s319] sm:$0xf] %v320
  %s322 = scalar_lea.vmem %s0, 140
  %v323 = vld [vmem:[%s322] sm:$0xf]
  %v324 = vunpack.c.l.bf16 %v323
  %v325 = vunpack.c.h.bf16 %v323
  %s326 = scalar_lea.vmem %s1, 92
  %v327 = vpack.c.bf16 0.0, %v324
  %328 = vst [vmem:[%s326] sm:$0xf] %v327
  %s329 = scalar_lea.vmem %s0, 68
  %v330 = vld [vmem:[%s329] sm:$0xf]
  %v331 = vunpack.c.l.bf16 %v330
  %v332 = vunpack.c.h.bf16 %v330
  %s333 = scalar_lea.vmem %s1, 164
  %v334 = vpack.c.bf16 0.0, %v331
  %335 = vst [vmem:[%s333] sm:$0xf] %v334
  %s336 = scalar_lea.vmem %s0, 188
  %v337 = vld [vmem:[%s336] sm:$0xf]
  %v338 = vunpack.c.l.bf16 %v337
  %v339 = vunpack.c.h.bf16 %v337
  %s340 = scalar_lea.vmem %s1, 44
  %v341 = vpack.c.bf16 0.0, %v338
  %342 = vst [vmem:[%s340] sm:$0xf] %v341
  %s343 = scalar_lea.vmem %s0, 116
  %v344 = vld [vmem:[%s343] sm:$0xf]
  %v345 = vunpack.c.l.bf16 %v344
  %v346 = vunpack.c.h.bf16 %v344
  %s347 = scalar_lea.vmem %s1, 116
  %v348 = vpack.c.bf16 0.0, %v345
  %349 = vst [vmem:[%s347] sm:$0xf] %v348
  %s350 = scalar_lea.vmem %s0, 44
  %v351 = vld [vmem:[%s350] sm:$0xf]
  %v352 = vunpack.c.l.bf16 %v351
  %v353 = vunpack.c.h.bf16 %v351
  %s354 = scalar_lea.vmem %s1, 188
  %v355 = vpack.c.bf16 0.0, %v352
  %356 = vst [vmem:[%s354] sm:$0xf] %v355
  %s357 = scalar_lea.vmem %s0, 164
  %v358 = vld [vmem:[%s357] sm:$0xf]
  %v359 = vunpack.c.l.bf16 %v358
  %v360 = vunpack.c.h.bf16 %v358
  %s361 = scalar_lea.vmem %s1, 68
  %v362 = vpack.c.bf16 0.0, %v359
  %363 = vst [vmem:[%s361] sm:$0xf] %v362
  %s364 = scalar_lea.vmem %s0, 92
  %v365 = vld [vmem:[%s364] sm:$0xf]
  %v366 = vunpack.c.l.bf16 %v365
  %v367 = vunpack.c.h.bf16 %v365
  %s368 = scalar_lea.vmem %s1, 140
  %v369 = vpack.c.bf16 0.0, %v366
  %370 = vst [vmem:[%s368] sm:$0xf] %v369
  %s371 = scalar_lea.vmem %s0, 20
  %v372 = vld [vmem:[%s371] sm:$0xf]
  %v373 = vunpack.c.l.bf16 %v372
  %v374 = vunpack.c.h.bf16 %v372
  %s375 = scalar_lea.vmem %s1, 212
  %v376 = vpack.c.bf16 0.0, %v373
  %377 = vst [vmem:[%s375] sm:$0xf] %v376

// kernel: _forward.5
$region0: #{_forward.5}
  #allocation0 [shape = 'u32[]', space=smem, size = 0x4, offset = 0x4, fixed_abs, tag = 'smem constant byte address 0x4 - core index']
  #allocation1 [shape = 'u32[144,128]{1,0:T(1,128)}', space=vmem, size = 0x12000, scoped, tag = 'internal scratch']
  %s0 = inlined_call_operand.vmem [shape: bf16[128,144], index: 0, kind: input, shape index: {}]
  %s1 = inlined_call_operand.vmem [shape: bf16[144,128], index: 1, kind: input, shape index: {}]
  %s2 = inlined_call_operand.vmem [shape: f32[1,128], index: 2, kind: input, shape index: {}]
  %s3 = inlined_call_operand.vmem [shape: bf16[128,128], index: 3, kind: output, shape index: {}]
  %s4 = sld [smem:[#allocation0]]
  $region22: #{_forward.5} parent=0
    _
  %s6 = ssub.s32 1, %s4
  %s7 = scalar_select 0, %s6, %s4
  // Predicated region
  $region2: #{_forward.5} parent=0 // pred_check
    _
  $region3: #{_forward.5} parent=0 // pred_check_branch
    %9 = sbr.rel (0) target = $region5
  $region4: #{_forward.5} parent=0 // pred_region
    _
  $region5: #{_forward.5} parent=0 // pred_fallthru
    _
  // Predicated region
  $region6: #{_forward.5} parent=0 // pred_check
    _
  $region7: #{_forward.5} parent=0 // pred_check_branch
    %11 = sbr.rel (0) target = $region9
  $region8: #{_forward.5} parent=0 // pred_region
    _
  $region9: #{_forward.5} parent=0 // pred_fallthru
    _
  // Predicated region
  $region10: #{_forward.5} parent=0 // pred_check
    _
  $region11: #{_forward.5} parent=0 // pred_check_branch
    %13 = sbr.rel (0) target = $region13
  $region12: #{_forward.5} parent=0 // pred_region
    _
  $region13: #{_forward.5} parent=0 // pred_fallthru
    _
  %v15 = vld [vmem:[%s0] sm:$0xff]
  %v16 = vld [vmem:[%s0 + $0x8] sm:$0xff]
  %v17 = vld [vmem:[%s0 + $0x10] sm:$0xff]
  %v18 = vld [vmem:[%s0 + $0x18] sm:$0xff]
  %v19 = vld [vmem:[%s0 + $0x20] sm:$0xff]
  %v20 = vld [vmem:[%s0 + $0x28] sm:$0xff]
  %v21 = vld [vmem:[%s0 + $0x30] sm:$0xff]
  %v22 = vld [vmem:[%s0 + $0x38] sm:$0xff]
  %v23 = vld [vmem:[%s0 + $0x40] sm:$0xff]
  %v24 = vld [vmem:[%s0 + $0x48] sm:$0xff]
  %v25 = vld [vmem:[%s0 + $0x50] sm:$0xff]
  %v26 = vld [vmem:[%s0 + $0x58] sm:$0xff]
  %v27 = vld [vmem:[%s0 + $0x60] sm:$0xff]
  %v28 = vld [vmem:[%s0 + $0x68] sm:$0xff]
  %v29 = vld [vmem:[%s0 + $0x70] sm:$0xff]
  %v30 = vld [vmem:[%s0 + $0x78] sm:$0xff]
  %v31 = vld [vmem:[%s1] sm:$0xf]
  %v32 = vld [vmem:[%s1 + $0x4] sm:$0xf]
  %v33 = vld [vmem:[%s1 + $0x8] sm:$0xf]
  %v34 = vld [vmem:[%s1 + $0xc] sm:$0xf]
  %v35 = vld [vmem:[%s1 + $0x10] sm:$0xf]
  %v36 = vld [vmem:[%s1 + $0x14] sm:$0xf]
  %v37 = vld [vmem:[%s1 + $0x18] sm:$0xf]
  %v38 = vld [vmem:[%s1 + $0x1c] sm:$0xf]
  %v39 = vld [vmem:[%s1 + $0x20] sm:$0xf]
  %v40 = vld [vmem:[%s1 + $0x24] sm:$0xf]
  %v41 = vld [vmem:[%s1 + $0x28] sm:$0xf]
  %v42 = vld [vmem:[%s1 + $0x2c] sm:$0xf]
  %v43 = vld [vmem:[%s1 + $0x30] sm:$0xf]
  %v44 = vld [vmem:[%s1 + $0x34] sm:$0xf]
  %v45 = vld [vmem:[%s1 + $0x38] sm:$0xf]
  %v46 = vld [vmem:[%s1 + $0x3c] sm:$0xf]
  %v47 = vld [vmem:[%s1 + $0x40] sm:$0xf]
  %v48 = vld [vmem:[%s1 + $0x44] sm:$0xf]
  %v49 = vld [vmem:[%s2] sm:$0x1]
  %v51 = vlaneseq
  %v52 = vshrl.u32 %v51, 7
  %v53 = vsub.s32 0, %v52
  %v54 = vrot.slane %v49, %v53
  %v72 = vunpack.c.l.b16 %v15
  %v73 = vunpack.c.h.b16 %v15
  %v74 = vunpack.c.l.b16 %v16
  %v75 = vunpack.c.h.b16 %v16
  %v76 = vunpack.c.l.b16 %v17
  %v77 = vunpack.c.h.b16 %v17
  %v78 = vunpack.c.l.b16 %v18
  %v79 = vunpack.c.h.b16 %v18
  %v80 = vunpack.c.l.b16 %v19
  %v81 = vunpack.c.h.b16 %v19
  %v82 = vunpack.c.l.b16 %v20
  %v83 = vunpack.c.h.b16 %v20
  %v84 = vunpack.c.l.b16 %v21
  %v85 = vunpack.c.h.b16 %v21
  %v86 = vunpack.c.l.b16 %v22
  %v87 = vunpack.c.h.b16 %v22
  %v88 = vunpack.c.l.b16 %v23
  %v89 = vunpack.c.h.b16 %v23
  %v90 = vunpack.c.l.b16 %v24
  %v91 = vunpack.c.h.b16 %v24
  %v92 = vunpack.c.l.b16 %v25
  %v93 = vunpack.c.h.b16 %v25
  %v94 = vunpack.c.l.b16 %v26
  %v95 = vunpack.c.h.b16 %v26
  %v96 = vunpack.c.l.b16 %v27
  %v97 = vunpack.c.h.b16 %v27
  %v98 = vunpack.c.l.b16 %v28
  %v99 = vunpack.c.h.b16 %v28
  %v100 = vunpack.c.l.b16 %v29
  %v101 = vunpack.c.h.b16 %v29
  %v102 = vunpack.c.l.b16 %v30
  %v103 = vunpack.c.h.b16 %v30
  %v104 = vpack.c.b16 %v74, %v72
  %v105 = vpack.c.b16 %v75, %v73
  %v106 = vpack.c.b16 %v78, %v76
  %v107 = vpack.c.b16 %v79, %v77
  %v108 = vpack.c.b16 %v82, %v80
  %v109 = vpack.c.b16 %v83, %v81
  %v110 = vpack.c.b16 %v86, %v84
  %v111 = vpack.c.b16 %v87, %v85
  %v112 = vpack.c.b16 %v90, %v88
  %v113 = vpack.c.b16 %v91, %v89
  %v114 = vpack.c.b16 %v94, %v92
  %v115 = vpack.c.b16 %v95, %v93
  %v116 = vpack.c.b16 %v98, %v96
  %v117 = vpack.c.b16 %v99, %v97
  %v118 = vpack.c.b16 %v102, %v100
  %v119 = vpack.c.b16 %v103, %v101
  %v146 = vunpack.c.l.b16 %v31
  %v147 = vunpack.c.l.b16 %v32
  %v148 = vunpack.c.l.b16 %v33
  %v149 = vunpack.c.l.b16 %v34
  %v150 = vunpack.c.l.b16 %v35
  %v151 = vunpack.c.l.b16 %v36
  %v152 = vunpack.c.l.b16 %v37
  %v153 = vunpack.c.l.b16 %v38
  %v154 = vunpack.c.l.b16 %v39
  %v155 = vunpack.c.l.b16 %v40
  %v156 = vunpack.c.l.b16 %v41
  %v157 = vunpack.c.l.b16 %v42
  %v158 = vunpack.c.l.b16 %v43
  %v159 = vunpack.c.l.b16 %v44
  %v160 = vunpack.c.l.b16 %v45
  %v161 = vunpack.c.l.b16 %v46
  %v162 = vunpack.c.l.b16 %v47
  %v163 = vunpack.c.l.b16 %v48
  %v164 = vpack.c.b16 %v147, %v146
  %v165 = vpack.c.b16 %v149, %v148
  %v166 = vpack.c.b16 %v151, %v150
  %v167 = vpack.c.b16 %v153, %v152
  %v168 = vpack.c.b16 %v155, %v154
  %v169 = vpack.c.b16 %v157, %v156
  %v170 = vpack.c.b16 %v159, %v158
  %v171 = vpack.c.b16 %v161, %v160
  %v172 = vpack.c.b16 %v163, %v162
  %vm182 = vcmask 130048
  %v184 = vsel %vm182, %v105, 0
  %v187 = vsel %vm182, %v107, 0
  %v190 = vsel %vm182, %v109, 0
  %v193 = vsel %vm182, %v111, 0
  %v196 = vsel %vm182, %v113, 0
  %v199 = vsel %vm182, %v115, 0
  %v202 = vsel %vm182, %v117, 0
  %v205 = vsel %vm182, %v119, 0
  %207 = vmatprep.subr.bf16.mxu0 0
  %208 = vmatpush1.bf16.msra.mxu0 %v171
  %209 = vmatprep.subr.bf16.mxu0 0
  %210 = vmatpush1.bf16.msra.mxu0 %v170
  %211 = vmatprep.subr.bf16.mxu0 0
  %212 = vmatpush1.bf16.msra.mxu0 %v169
  %213 = vmatprep.subr.bf16.mxu0 0
  %214 = vmatpush1.bf16.msra.mxu0 %v168
  %215 = vmatprep.subr.bf16.mxu0 0
  %216 = vmatpush1.bf16.msra.mxu0 %v167
  %217 = vmatprep.subr.bf16.mxu0 0
  %218 = vmatpush1.bf16.msra.mxu0 %v166
  %219 = vmatprep.subr.bf16.mxu0 0
  %220 = vmatpush1.bf16.msra.mxu0 %v165
  %221 = vmatprep.subr.bf16.mxu0 0
  %222 = vmatpush1.bf16.msra.mxu0 %v164
  %223 = vmatprep.subr.bf16.mxu0 0
  %224 = vmatpush2.bf16.msra.mxu0 0
  %225 = vmatprep.subr.bf16.mxu0 0
  %226 = vmatpush2.bf16.msra.mxu0 0
  %227 = vmatprep.subr.bf16.mxu0 0
  %228 = vmatpush2.bf16.msra.mxu0 0
  %229 = vmatprep.subr.bf16.mxu0 0
  %230 = vmatpush2.bf16.msra.mxu0 0
  %231 = vmatprep.subr.bf16.mxu0 0
  %232 = vmatpush2.bf16.msra.mxu0 0
  %233 = vmatprep.subr.bf16.mxu0 0
  %234 = vmatpush2.bf16.msra.mxu0 0
  %235 = vmatprep.subr.bf16.mxu0 0
  %236 = vmatpush2.bf16.msra.mxu0 0
  %237 = vmatprep.subr.bf16.mxu0 0
  %238 = vmatpush2.bf16.msra.mxu0 %v172
  %239 = vmatprep.mubr.bf16.mxu0 %v184
  %240 = vmatmul.mubr.bf16.gmra.mxu0 %v104
  %v241 = vpop.f32.mrf.mxu0
  %v242 = vadd.f32 %v54, %v241
  %v243 = vpop.f32.mrf.mxu0
  %v244 = vpop.f32.mrf.mxu0
  %v245 = vadd.f32 %v54, %v244
  %v246 = vpop.f32.mrf.mxu0
  %247 = vmatprep.mubr.bf16.mxu0 %v187
  %248 = vmatmul.mubr.bf16.gmra.mxu0 %v106
  %v249 = vpop.f32.mrf.mxu0
  %v250 = vadd.f32 %v54, %v249
  %v251 = vpop.f32.mrf.mxu0
  %v252 = vpop.f32.mrf.mxu0
  %v253 = vadd.f32 %v54, %v252
  %v254 = vpop.f32.mrf.mxu0
  %255 = vmatprep.mubr.bf16.mxu0 %v190
  %256 = vmatmul.mubr.bf16.gmra.mxu0 %v108
  %v257 = vpop.f32.mrf.mxu0
  %v258 = vadd.f32 %v54, %v257
  %v259 = vpop.f32.mrf.mxu0
  %v260 = vpop.f32.mrf.mxu0
  %v261 = vadd.f32 %v54, %v260
  %v262 = vpop.f32.mrf.mxu0
  %263 = vmatprep.mubr.bf16.mxu0 %v193
  %264 = vmatmul.mubr.bf16.gmra.mxu0 %v110
  %v265 = vpop.f32.mrf.mxu0
  %v266 = vadd.f32 %v54, %v265
  %v267 = vpop.f32.mrf.mxu0
  %v268 = vpop.f32.mrf.mxu0
  %v269 = vadd.f32 %v54, %v268
  %v270 = vpop.f32.mrf.mxu0
  %271 = vmatprep.mubr.bf16.mxu0 %v196
  %272 = vmatmul.mubr.bf16.gmra.mxu0 %v112
  %v273 = vpop.f32.mrf.mxu0
  %v274 = vadd.f32 %v54, %v273
  %v275 = vpop.f32.mrf.mxu0
  %v276 = vpop.f32.mrf.mxu0
  %v277 = vadd.f32 %v54, %v276
  %v278 = vpop.f32.mrf.mxu0
  %279 = vmatprep.mubr.bf16.mxu0 %v199
  %280 = vmatmul.mubr.bf16.gmra.mxu0 %v114
  %v281 = vpop.f32.mrf.mxu0
  %v282 = vadd.f32 %v54, %v281
  %v283 = vpop.f32.mrf.mxu0
  %v284 = vpop.f32.mrf.mxu0
  %v285 = vadd.f32 %v54, %v284
  %v286 = vpop.f32.mrf.mxu0
  %287 = vmatprep.mubr.bf16.mxu0 %v202
  %288 = vmatmul.mubr.bf16.gmra.mxu0 %v116
  %v289 = vpop.f32.mrf.mxu0
  %v290 = vadd.f32 %v54, %v289
  %v291 = vpop.f32.mrf.mxu0
  %v292 = vpop.f32.mrf.mxu0
  %v293 = vadd.f32 %v54, %v292
  %v294 = vpop.f32.mrf.mxu0
  %295 = vmatprep.mubr.bf16.mxu0 %v205
  %296 = vmatmul.mubr.bf16.gmra.mxu0 %v118
  %v297 = vpop.f32.mrf.mxu0
  %v298 = vadd.f32 %v54, %v297
  %v299 = vpop.f32.mrf.mxu0
  %v300 = vpop.f32.mrf.mxu0
  %v301 = vadd.f32 %v54, %v300
  %v302 = vpop.f32.mrf.mxu0
  %303 = vdwg.mxu0
  %v304 = vmax.f32 %v242, 0.0
  %v305 = vmax.f32 %v245, 0.0
  %v306 = vmax.f32 %v250, 0.0
  %v307 = vmax.f32 %v253, 0.0
  %v308 = vmax.f32 %v258, 0.0
  %v309 = vmax.f32 %v261, 0.0
  %v310 = vmax.f32 %v266, 0.0
  %v311 = vmax.f32 %v269, 0.0
  %v312 = vmax.f32 %v274, 0.0
  %v313 = vmax.f32 %v277, 0.0
  %v314 = vmax.f32 %v282, 0.0
  %v315 = vmax.f32 %v285, 0.0
  %v316 = vmax.f32 %v290, 0.0
  %v317 = vmax.f32 %v293, 0.0
  %v318 = vmax.f32 %v298, 0.0
  %v319 = vmax.f32 %v301, 0.0
  %v320 = vpack.c.bf16 %v305, %v304
  %v321 = vpack.c.bf16 %v307, %v306
  %v322 = vpack.c.bf16 %v309, %v308
  %v323 = vpack.c.bf16 %v311, %v310
  %v324 = vpack.c.bf16 %v313, %v312
  %v325 = vpack.c.bf16 %v315, %v314
  %v326 = vpack.c.bf16 %v317, %v316
  %v327 = vpack.c.bf16 %v319, %v318
  %v336 = vunpack.c.l.b16 %v320
  %v337 = vunpack.c.h.b16 %v320
  %v338 = vunpack.c.l.b16 %v321
  %v339 = vunpack.c.h.b16 %v321
  %v340 = vunpack.c.l.b16 %v322
  %v341 = vunpack.c.h.b16 %v322
  %v342 = vunpack.c.l.b16 %v323
  %v343 = vunpack.c.h.b16 %v323
  %v344 = vunpack.c.l.b16 %v324
  %v345 = vunpack.c.h.b16 %v324
  %v346 = vunpack.c.l.b16 %v325
  %v347 = vunpack.c.h.b16 %v325
  %v348 = vunpack.c.l.b16 %v326
  %v349 = vunpack.c.h.b16 %v326
  %v350 = vunpack.c.l.b16 %v327
  %v351 = vunpack.c.h.b16 %v327
  %v352 = vpack.c.b16 %v336, %v336
  %v353 = vpack.c.b16 %v337, %v337
  %v354 = vpack.c.b16 %v338, %v338
  %v355 = vpack.c.b16 %v339, %v339
  %v356 = vpack.c.b16 %v340, %v340
  %v357 = vpack.c.b16 %v341, %v341
  %v358 = vpack.c.b16 %v342, %v342
  %v359 = vpack.c.b16 %v343, %v343
  %v360 = vpack.c.b16 %v344, %v344
  %v361 = vpack.c.b16 %v345, %v345
  %v362 = vpack.c.b16 %v346, %v346
  %v363 = vpack.c.b16 %v347, %v347
  %v364 = vpack.c.b16 %v348, %v348
  %v365 = vpack.c.b16 %v349, %v349
  %v366 = vpack.c.b16 %v350, %v350
  %v367 = vpack.c.b16 %v351, %v351
  %384 = vst [vmem:[%s3] sm:$0xf] %v352
  %385 = vst [vmem:[%s3 + $0x4] sm:$0xf] %v353
  %386 = vst [vmem:[%s3 + $0x8] sm:$0xf] %v354
  %387 = vst [vmem:[%s3 + $0xc] sm:$0xf] %v355
  %388 = vst [vmem:[%s3 + $0x10] sm:$0xf] %v356
  %389 = vst [vmem:[%s3 + $0x14] sm:$0xf] %v357
  %390 = vst [vmem:[%s3 + $0x18] sm:$0xf] %v358
  %391 = vst [vmem:[%s3 + $0x1c] sm:$0xf] %v359
  %392 = vst [vmem:[%s3 + $0x20] sm:$0xf] %v360
  %393 = vst [vmem:[%s3 + $0x24] sm:$0xf] %v361
  %394 = vst [vmem:[%s3 + $0x28] sm:$0xf] %v362
  %395 = vst [vmem:[%s3 + $0x2c] sm:$0xf] %v363
  %396 = vst [vmem:[%s3 + $0x30] sm:$0xf] %v364
  %397 = vst [vmem:[%s3 + $0x34] sm:$0xf] %v365
  %398 = vst [vmem:[%s3 + $0x38] sm:$0xf] %v366
  %399 = vst [vmem:[%s3 + $0x3c] sm:$0xf] %v367
  // Predicated region
  $region14: #{_forward.5} parent=0 // pred_check
    _
  $region15: #{_forward.5} parent=0 // pred_check_branch
    %401 = sbr.rel (0) target = $region17
  $region16: #{_forward.5} parent=0 // pred_region
    _
  $region17: #{_forward.5} parent=0 // pred_fallthru
    _
  // Predicated region
  $region18: #{_forward.5} parent=0 // pred_check
    _
  $region19: #{_forward.5} parent=0 // pred_check_branch
    %403 = sbr.rel (0) target = $region21
  $region20: #{_forward.5} parent=0 // pred_region
    _
  $region21: #{_forward.5} parent=0 // pred_fallthru
    _

</llo_original>
